<compile_context>
chip_gen: v7x
topology: tpu7x:2x2x1
jax: 0.10.0
libtpu: 0.0.40
codegen_flags: <defaults>
</compile_context>

<pallas_src>
import functools
import math

import jax
import jax.numpy as jnp
from jax import lax
from jax.experimental import pallas as pl
from jax.experimental.pallas import tpu as pltpu

EPS = 1e-5  # LayerNorm / GroupNorm eps (PyTorch default)


def _layernorm(z, w, b):
    mu = jnp.mean(z, axis=-1, keepdims=True)
    var = jnp.mean(jnp.square(z - mu), axis=-1, keepdims=True)
    return (z - mu) * lax.rsqrt(var + EPS) * w + b


def _time_shift(z, state_row):
    # sx[0] = state_row, sx[t] = z[t-1] for t > 0.
    # (A pltpu.roll(z, shift=1, axis=0) + select would avoid the small
    #  sublane-crossing copies; concatenate kept for robustness at these sizes.)
    return jnp.concatenate([state_row, z[:z.shape[0] - 1, :]], axis=0)


def rwkv_block_kernel(
    # ---- inputs ----
    x_ref, sxx_ref, skv_ref, sffn_ref,
    ln0w_ref, ln0b_ref, ln1w_ref, ln1b_ref, ln2w_ref, ln2b_ref,
    u_ref, dpow_ref, dinv_ref, dend_ref, dchk_ref,
    watt_ref, wo_ref, gnw_ref, gnb_ref,
    wffn_ref, wfv_ref,
    # ---- outputs ----
    ox_ref, oxx_ref, oskv_ref, osffn_ref,
    # ---- scratch ----
    rsc, ksc, vsc, ysc,
    *, n_head, head_size, head_size_divisor, apply_ln0,
):
    T, C = x_ref.shape
    H, N = n_head, head_size
    A = H * N
    Tc = dpow_ref.shape[0]          # chunk length (divides T)
    n_chunk = T // Tc
    Fd = wfv_ref.shape[0]           # dim_ffn

    x = x_ref[...]
    if apply_ln0:
        x = _layernorm(x, ln0w_ref[...], ln0b_ref[...])

    # ---------------- attention (RWKV_TimeMix_RWKV5) ----------------
    xln1 = _layernorm(x, ln1w_ref[...], ln1b_ref[...])
    oxx_ref[...] = xln1[T - 1:T, :]                      # x_x = ln1(x)[-1]

    sx = _time_shift(xln1, sxx_ref[...])
    d = xln1 - sx
    # fused r|k|v|g projection: [sx | d] @ [[W_r..W_g],[tm_r*W_r..tm_g*W_g]]
    lhs = jnp.concatenate([sx, d], axis=1).astype(jnp.bfloat16)        # (T, 2C)
    rkvg = jnp.dot(lhs, watt_ref[...], preferred_element_type=jnp.float32)

    rsc[...] = rkvg[:, 0 * A:1 * A]
    ksc[...] = rkvg[:, 1 * A:2 * A]
    vsc[...] = rkvg[:, 2 * A:3 * A]
    gp = rkvg[:, 3 * A:4 * A]
    g = gp * jax.nn.sigmoid(gp)                          # SiLU

    # host-precomputed decay tensors (w = exp(-exp(time_decay)))
    u_row = u_ref[...]                                   # (1, A)  time_faaaa
    dpow = dpow_ref[...]                                 # (Tc, A) w^t
    dinv = dinv_ref[...]                                 # (Tc, A) w^{-(t+1)}
    dend = dend_ref[...]                                 # (Tc, A) w^{Tc-1-t}
    dchk = dchk_ref[...]                                 # (A, 1)  w^{Tc} column

    ri = lax.broadcasted_iota(jnp.int32, (Tc, Tc), 0)
    ci = lax.broadcasted_iota(jnp.int32, (Tc, Tc), 1)
    strict = (ri > ci).astype(jnp.float32)               # 1 where s < t

    # Chunked WKV-5: per chunk, y = ((Rd @ Kd^T)*mask) @ V + (r.u.k)V + Rd @ M,
    # M' = M * w^Tc + (K*w_end)^T @ V  (all per-head MXU matmuls, fp32).
    def chunk_body(c, M):
        s0 = pl.multiple_of(c * Tc, Tc)
        r_blk = rsc[pl.ds(s0, Tc), :]
        k_blk = ksc[pl.ds(s0, Tc), :]
        v_blk = vsc[pl.ds(s0, Tc), :]
        y_parts, m_parts = [], []
        for h in range(H):                               # static unroll over heads
            sl = slice(h * N, (h + 1) * N)
            r_h, k_h, v_h = r_blk[:, sl], k_blk[:, sl], v_blk[:, sl]
            m_h = M[h]                                   # (N, N) [key, value]
            rd = r_h * dpow[:, sl]                       # r_t * w^t
            kdiv = k_h * dinv[:, sl]                     # k_s * w^{-(s+1)}
            att = lax.dot_general(rd, kdiv, (((1,), (1,)), ((), ())),
                                  preferred_element_type=jnp.float32)
            att = att * strict                           # keep s < t terms
            ruk = jnp.sum(r_h * u_row[:, sl] * k_h, axis=-1, keepdims=True)
            y_h = (jnp.dot(att, v_h, preferred_element_type=jnp.float32)
                   + ruk * v_h
                   + jnp.dot(rd, m_h, preferred_element_type=jnp.float32))
            ke = k_h * dend[:, sl]                       # k_s * w^{Tc-1-s}
            m_parts.append(
                m_h * dchk[sl, :]
                + lax.dot_general(ke, v_h, (((0,), (0,)), ((), ())),
                                  preferred_element_type=jnp.float32))
            y_parts.append(y_h)
        y_all = y_parts[0] if H == 1 else jnp.concatenate(y_parts, axis=1)
        ysc[pl.ds(s0, Tc), :] = y_all
        return jnp.stack(m_parts, axis=0)

    M_fin = lax.fori_loop(0, n_chunk, chunk_body, skv_ref[...])
    oskv_ref[...] = M_fin

    # GroupNorm(n_head) per head after dividing by head_size_divisor
    y = ysc[...] * (1.0 / head_size_divisor)             # (T, A)
    yh = y.reshape(T, H, N)
    mu = jnp.mean(yh, axis=-1, keepdims=True)
    var = jnp.mean(jnp.square(yh - mu), axis=-1, keepdims=True)
    yn = ((yh - mu) * lax.rsqrt(var + EPS)).reshape(T, A)
    yn = yn * gnw_ref[...] + gnb_ref[...]

    att_out = jnp.dot((yn * g).astype(jnp.bfloat16), wo_ref[...],
                      preferred_element_type=jnp.float32)
    x = x + att_out                                      # residual 1

    # ---------------- channel mix (RWKV_ChannelMix) ----------------
    xln2 = _layernorm(x, ln2w_ref[...], ln2b_ref[...])
    osffn_ref[...] = xln2[T - 1:T, :]                    # new state_ffn

    sxf = _time_shift(xln2, sffn_ref[...])
    df = xln2 - sxf
    lhs_f = jnp.concatenate([sxf, df], axis=1).astype(jnp.bfloat16)    # (T, 2C)
    kr = jnp.dot(lhs_f, wffn_ref[...], preferred_element_type=jnp.float32)

    kk = jnp.square(jnp.maximum(kr[:, :Fd], 0.0))        # relu(k)**2
    rr = jax.nn.sigmoid(kr[:, Fd:])
    kv = jnp.dot(kk.astype(jnp.bfloat16), wfv_ref[...],
                 preferred_element_type=jnp.float32)
    ox_ref[...] = x + rr * kv                            # residual 2


def rwkv_block(x, state_xx, state_kv, state_ffn, p, *, n_head, head_size,
               head_size_divisor, apply_ln0, chunk=16):
    T, C = x.shape
    H, N = n_head, head_size
    A = H * N
    Tc = math.gcd(T, chunk)                              # chunk length dividing T
    bf16, f32 = jnp.bfloat16, jnp.float32

    row = lambda a: a.reshape(1, -1).astype(f32)

    # ---- host-side parameter folding (cache these per layer in a real model) ----
    w_att = jnp.concatenate([
        jnp.concatenate([p["w_r"], p["w_k"], p["w_v"], p["w_g"]], axis=1),
        jnp.concatenate([p["tmr"][:, None] * p["w_r"],
                         p["tmk"][:, None] * p["w_k"],
                         p["tmv"][:, None] * p["w_v"],
                         p["tmg"][:, None] * p["w_g"]], axis=1),
    ], axis=0).astype(bf16)                              # (2C, 4A)
    w_ffn = jnp.concatenate([
        jnp.concatenate([p["w_fk"], p["w_fr"]], axis=1),
        jnp.concatenate([p["f_tmk"][:, None] * p["w_fk"],
                         p["f_tmr"][:, None] * p["w_fr"]], axis=1),
    ], axis=0).astype(bf16)                              # (2C, F+C)

    ln_w = -jnp.exp(p["time_decay"].astype(f32).reshape(1, A))  # log decay, (1, A)
    t = jnp.arange(Tc, dtype=f32)[:, None]                      # (Tc, 1)
    decay_pow = jnp.exp(ln_w * t)                               # w^t
    decay_inv = jnp.exp(-ln_w * (t + 1.0))                      # w^{-(t+1)}
    decay_end = jnp.exp(ln_w * (Tc - 1.0 - t))                  # w^{Tc-1-t}
    decay_chk = jnp.exp(ln_w * float(Tc)).reshape(A, 1)         # w^{Tc} column
    u_row = p["time_faaaa"].astype(f32).reshape(1, A)

    inputs = (
        x.astype(f32), row(state_xx), state_kv.astype(f32), row(state_ffn),
        row(p["ln0_w"]), row(p["ln0_b"]),
        row(p["ln1_w"]), row(p["ln1_b"]),
        row(p["ln2_w"]), row(p["ln2_b"]),
        u_row, decay_pow, decay_inv, decay_end, decay_chk,
        w_att, p["w_o"].astype(bf16),
        row(p["gn_w"]), row(p["gn_b"]),
        w_ffn, p["w_fv"].astype(bf16),
    )

    out_shape = (
        jax.ShapeDtypeStruct((T, C), f32),
        jax.ShapeDtypeStruct((1, C), f32),
        jax.ShapeDtypeStruct((H, N, N), f32),
        jax.ShapeDtypeStruct((1, C), f32),
    )
    vmem = pl.BlockSpec(memory_space=pltpu.MemorySpace.VMEM)

    kernel = functools.partial(
        rwkv_block_kernel, n_head=H, head_size=N,
        head_size_divisor=head_size_divisor, apply_ln0=apply_ln0)

    x_out, xx_out, skv_out, sffn_out = pl.pallas_call(
        kernel,
        out_shape=out_shape,
        in_specs=[vmem] * len(inputs),
        out_specs=(vmem, vmem, vmem, vmem),
        scratch_shapes=[pltpu.VMEM((T, A), f32) for _ in range(4)],
        # state_kv (input 2) aliases output 2 -> in-place state update
        input_output_aliases={2: 2},
    )(*inputs)
    return x_out, xx_out.reshape(C), skv_out, sffn_out.reshape(C)


# ------------------------- pure-JAX reference -------------------------
# Follows the module math step-by-step (sequential WKV scan); linear layers use
# bf16 weights/activations with fp32 accumulation, matching the module's CUDA
# bf16 branch and the kernel's MXU path.
def rwkv_block_ref(x, state_xx, state_kv, state_ffn, p, *, n_head, head_size,
                   head_size_divisor, apply_ln0):
    T, C = x.shape
    H, N = n_head, head_size
    A = H * N

    def ln(z, w, b):
        mu = jnp.mean(z, -1, keepdims=True)
        var = jnp.mean((z - mu) ** 2, -1, keepdims=True)
        return (z - mu) / jnp.sqrt(var + EPS) * w + b

    def bdot(a, w):
        return jnp.dot(a.astype(jnp.bfloat16), w.astype(jnp.bfloat16),
                       preferred_element_type=jnp.float32)

    if apply_ln0:
        x = ln(x, p["ln0_w"], p["ln0_b"])
    x1 = ln(x, p["ln1_w"], p["ln1_b"])
    x_x = x1[-1]
    sx = jnp.concatenate([state_xx[None, :], x1[:-1]], axis=0)
    mix = lambda m: x1 * m + sx * (1 - m)
    r = bdot(mix(p["tmr"]), p["w_r"])
    k = bdot(mix(p["tmk"]), p["w_k"])
    v = bdot(mix(p["tmv"]), p["w_v"])
    gp = bdot(mix(p["tmg"]), p["w_g"])
    g = gp * jax.nn.sigmoid(gp)

    w_dec = jnp.exp(-jnp.exp(p["time_decay"]))
    u = p["time_faaaa"]
    r3, k3, v3 = (a.reshape(T, H, N) for a in (r, k, v))

    def step(M, rkv):
        r_t, k_t, v_t = rkv
        ruk = jnp.sum(r_t * u * k_t, -1, keepdims=True)
        y_t = v_t * ruk + jnp.sum(M * r_t[:, :, None], axis=1)
        M = M * w_dec[:, :, None] + k_t[:, :, None] * v_t[:, None, :]
        return M, y_t

    M_fin, ys = lax.scan(step, state_kv, (r3, k3, v3))
    y = ys / head_size_divisor
    mu = jnp.mean(y, -1, keepdims=True)
    var = jnp.mean((y - mu) ** 2, -1, keepdims=True)
    yn = (y - mu) / jnp.sqrt(var + EPS)
    yn = yn.reshape(T, A) * p["gn_w"] + p["gn_b"]
    x = x + bdot(yn * g, p["w_o"])

    x2 = ln(x, p["ln2_w"], p["ln2_b"])
    sffn_new = x2[-1]
    sxf = jnp.concatenate([state_ffn[None, :], x2[:-1]], axis=0)
    fxk = x2 * p["f_tmk"] + sxf * (1 - p["f_tmk"])
    fxr = x2 * p["f_tmr"] + sxf * (1 - p["f_tmr"])
    kk = jnp.square(jnp.maximum(bdot(fxk, p["w_fk"]), 0.0))
    x = x + jax.nn.sigmoid(bdot(fxr, p["w_fr"])) * bdot(kk, p["w_fv"])
    return x, x_x, M_fin, sffn_new


# ------------------------- deterministic params -------------------------
def make_params(key, C, A, F, H, N, layer_id, n_layer):
    r01 = layer_id / (n_layer - 1)
    r1a0 = 1.0 - layer_id / n_layer
    i = jnp.arange(C, dtype=jnp.float32)
    ddd = i / C
    n = jnp.arange(A, dtype=jnp.float32)
    decay_speed = -6.0 + 5.0 * (n / (A - 1)) ** (0.7 + 1.3 * r01)
    zigzag = (jnp.mod(n + 1, 3) - 1.0) * 0.1
    time_faaaa = r01 * (1.0 - n / (A - 1)) + zigzag

    ks = jax.random.split(key, 8)

    def lin(k, fan_in, fan_out):
        bound = 1.0 / (fan_in ** 0.5)
        # stored transposed (in, out) so kernels compute x @ W
        return jax.random.uniform(k, (fan_in, fan_out), jnp.float32, -bound, bound)

    return dict(
        ln0_w=jnp.ones((C,), jnp.float32), ln0_b=jnp.zeros((C,), jnp.float32),
        ln1_w=jnp.ones((C,), jnp.float32), ln1_b=jnp.zeros((C,), jnp.float32),
        ln2_w=jnp.ones((C,), jnp.float32), ln2_b=jnp.zeros((C,), jnp.float32),
        tmk=ddd ** r1a0,
        tmv=ddd ** r1a0 + 0.3 * r01,
        tmr=ddd ** (0.5 * r1a0),
        tmg=ddd ** (0.5 * r1a0),
        time_decay=decay_speed.reshape(H, N),
        time_faaaa=time_faaaa.reshape(H, N),
        w_r=lin(ks[0], C, A), w_k=lin(ks[1], C, A), w_v=lin(ks[2], C, A),
        w_g=lin(ks[3], C, A), w_o=lin(ks[4], A, C),
        gn_w=jnp.ones((A,), jnp.float32), gn_b=jnp.zeros((A,), jnp.float32),
        f_tmk=ddd ** r1a0, f_tmr=ddd ** r1a0,
        w_fk=lin(ks[5], C, F), w_fr=lin(ks[6], C, C), w_fv=lin(ks[7], F, C),
    )


if __name__ == "__main__":
    # small shapes: T=8 tokens, n_embd=dim_att=64 (HEAD_SIZE=64 -> 1 head), dim_ffn=128
    T, C = 8, 64
    H, N = 1, 64          # n_head, head_size (HEAD_SIZE == 64)
    A = H * N             # dim_att
    F = 128               # dim_ffn
    n_layer, layer_id = 4, 0
    head_size_divisor = 8.0

    key = jax.random.PRNGKey(0)
    k_x, k_sxx, k_skv, k_sffn, k_p = jax.random.split(key, 5)
    x = jax.random.normal(k_x, (T, C), jnp.float32)
    state_xx = jax.random.normal(k_sxx, (C,), jnp.float32)
    state_kv = 0.1 * jax.random.normal(k_skv, (H, N, N), jnp.float32)
    state_ffn = jax.random.normal(k_sffn, (C,), jnp.float32)
    params = make_params(k_p, C, A, F, H, N, layer_id, n_layer)

    # compute the reference first (the kernel call may alias/donate state_kv)
    ref = rwkv_block_ref(x, state_xx, state_kv, state_ffn, params,
                         n_head=H, head_size=N,
                         head_size_divisor=head_size_divisor,
                         apply_ln0=(layer_id == 0))
    ref = jax.block_until_ready(ref)

    out = rwkv_block(x, state_xx, state_kv, state_ffn, params,
                     n_head=H, head_size=N,
                     head_size_divisor=head_size_divisor,
                     apply_ln0=(layer_id == 0))
    out = jax.block_until_ready(out)

    # bf16 MXU path (matching the module's CUDA bf16 branch) + chunked-vs-scan
    # WKV reformulation => compare with a modest tolerance.
    for got, want in zip(out, ref):
        assert got.shape == want.shape, (got.shape, want.shape)
        err = float(jnp.max(jnp.abs(got - want)))
        assert bool(jnp.allclose(got, want, atol=4e-2, rtol=4e-2)), err

    print("KERNEL_OK")
</pallas_src>

<mosaic_0001>
module attributes {stable_mosaic.version = 11 : i64} {
  func.func @rwkv_block_kernel(%arg0: memref<8x64xf32, #tpu.memory_space<vmem>>, %arg1: memref<1x64xf32, #tpu.memory_space<vmem>>, %arg2: memref<1x64x64xf32, #tpu.memory_space<vmem>>, %arg3: memref<1x64xf32, #tpu.memory_space<vmem>>, %arg4: memref<1x64xf32, #tpu.memory_space<vmem>>, %arg5: memref<1x64xf32, #tpu.memory_space<vmem>>, %arg6: memref<1x64xf32, #tpu.memory_space<vmem>>, %arg7: memref<1x64xf32, #tpu.memory_space<vmem>>, %arg8: memref<1x64xf32, #tpu.memory_space<vmem>>, %arg9: memref<1x64xf32, #tpu.memory_space<vmem>>, %arg10: memref<1x64xf32, #tpu.memory_space<vmem>>, %arg11: memref<8x64xf32, #tpu.memory_space<vmem>>, %arg12: memref<8x64xf32, #tpu.memory_space<vmem>>, %arg13: memref<8x64xf32, #tpu.memory_space<vmem>>, %arg14: memref<64x1xf32, #tpu.memory_space<vmem>>, %arg15: memref<128x256xbf16, #tpu.memory_space<vmem>>, %arg16: memref<64x64xbf16, #tpu.memory_space<vmem>>, %arg17: memref<1x64xf32, #tpu.memory_space<vmem>>, %arg18: memref<1x64xf32, #tpu.memory_space<vmem>>, %arg19: memref<128x192xbf16, #tpu.memory_space<vmem>>, %arg20: memref<128x64xbf16, #tpu.memory_space<vmem>>, %arg21: memref<8x64xf32, #tpu.memory_space<vmem>>, %arg22: memref<1x64xf32, #tpu.memory_space<vmem>>, %arg23: memref<1x64x64xf32, #tpu.memory_space<vmem>>, %arg24: memref<1x64xf32, #tpu.memory_space<vmem>>, %arg25: memref<8x64xf32, #tpu.memory_space<vmem>>, %arg26: memref<8x64xf32, #tpu.memory_space<vmem>>, %arg27: memref<8x64xf32, #tpu.memory_space<vmem>>, %arg28: memref<8x64xf32, #tpu.memory_space<vmem>>) attributes {dimension_semantics = [], scalar_prefetch = 0 : i64, scratch_operands = 4 : i64, tpu.core_type = #tpu.core_type<tc>} {
    %c0 = arith.constant 0 : index
    %c0_0 = arith.constant 0 : index
    %0 = vector.load %arg0[%c0, %c0_0] : memref<8x64xf32, #tpu.memory_space<vmem>>, vector<8x64xf32>
    %c0_1 = arith.constant 0 : index
    %c0_2 = arith.constant 0 : index
    %1 = vector.load %arg4[%c0_1, %c0_2] : memref<1x64xf32, #tpu.memory_space<vmem>>, vector<1x64xf32>
    %c0_3 = arith.constant 0 : index
    %c0_4 = arith.constant 0 : index
    %2 = vector.load %arg5[%c0_3, %c0_4] : memref<1x64xf32, #tpu.memory_space<vmem>>, vector<1x64xf32>
    %cst = arith.constant dense<0.000000e+00> : vector<8xf32>
    %3 = vector.multi_reduction <add>, %0, %cst [1] : vector<8x64xf32> to vector<8xf32>
    %4 = vector.shape_cast %3 : vector<8xf32> to vector<8x1xf32>
    %cst_5 = arith.constant 6.400000e+01 : f32
    %5 = vector.broadcast %cst_5 : f32 to vector<8x1xf32>
    %6 = arith.divf %4, %5 : vector<8x1xf32>
    %7 = vector.broadcast %6 : vector<8x1xf32> to vector<8x64xf32>
    %8 = arith.subf %0, %7 : vector<8x64xf32>
    %9 = arith.mulf %8, %8 : vector<8x64xf32>
    %cst_6 = arith.constant dense<0.000000e+00> : vector<8xf32>
    %10 = vector.multi_reduction <add>, %9, %cst_6 [1] : vector<8x64xf32> to vector<8xf32>
    %11 = vector.shape_cast %10 : vector<8xf32> to vector<8x1xf32>
    %cst_7 = arith.constant 6.400000e+01 : f32
    %12 = vector.broadcast %cst_7 : f32 to vector<8x1xf32>
    %13 = arith.divf %11, %12 : vector<8x1xf32>
    %14 = vector.broadcast %6 : vector<8x1xf32> to vector<8x64xf32>
    %15 = arith.subf %0, %14 : vector<8x64xf32>
    %cst_8 = arith.constant 9.99999974E-6 : f32
    %16 = vector.broadcast %cst_8 : f32 to vector<8x1xf32>
    %17 = arith.addf %13, %16 : vector<8x1xf32>
    %18 = math.rsqrt %17 : vector<8x1xf32>
    %19 = vector.broadcast %18 : vector<8x1xf32> to vector<8x64xf32>
    %20 = arith.mulf %15, %19 : vector<8x64xf32>
    %21 = vector.broadcast %1 : vector<1x64xf32> to vector<8x64xf32>
    %22 = arith.mulf %20, %21 : vector<8x64xf32>
    %23 = vector.broadcast %2 : vector<1x64xf32> to vector<8x64xf32>
    %24 = arith.addf %22, %23 : vector<8x64xf32>
    %c0_9 = arith.constant 0 : index
    %c0_10 = arith.constant 0 : index
    %25 = vector.load %arg6[%c0_9, %c0_10] : memref<1x64xf32, #tpu.memory_space<vmem>>, vector<1x64xf32>
    %c0_11 = arith.constant 0 : index
    %c0_12 = arith.constant 0 : index
    %26 = vector.load %arg7[%c0_11, %c0_12] : memref<1x64xf32, #tpu.memory_space<vmem>>, vector<1x64xf32>
    %cst_13 = arith.constant dense<0.000000e+00> : vector<8xf32>
    %27 = vector.multi_reduction <add>, %24, %cst_13 [1] : vector<8x64xf32> to vector<8xf32>
    %28 = vector.shape_cast %27 : vector<8xf32> to vector<8x1xf32>
    %cst_14 = arith.constant 6.400000e+01 : f32
    %29 = vector.broadcast %cst_14 : f32 to vector<8x1xf32>
    %30 = arith.divf %28, %29 : vector<8x1xf32>
    %31 = vector.broadcast %30 : vector<8x1xf32> to vector<8x64xf32>
    %32 = arith.subf %24, %31 : vector<8x64xf32>
    %33 = arith.mulf %32, %32 : vector<8x64xf32>
    %cst_15 = arith.constant dense<0.000000e+00> : vector<8xf32>
    %34 = vector.multi_reduction <add>, %33, %cst_15 [1] : vector<8x64xf32> to vector<8xf32>
    %35 = vector.shape_cast %34 : vector<8xf32> to vector<8x1xf32>
    %cst_16 = arith.constant 6.400000e+01 : f32
    %36 = vector.broadcast %cst_16 : f32 to vector<8x1xf32>
    %37 = arith.divf %35, %36 : vector<8x1xf32>
    %38 = vector.broadcast %30 : vector<8x1xf32> to vector<8x64xf32>
    %39 = arith.subf %24, %38 : vector<8x64xf32>
    %cst_17 = arith.constant 9.99999974E-6 : f32
    %40 = vector.broadcast %cst_17 : f32 to vector<8x1xf32>
    %41 = arith.addf %37, %40 : vector<8x1xf32>
    %42 = math.rsqrt %41 : vector<8x1xf32>
    %43 = vector.broadcast %42 : vector<8x1xf32> to vector<8x64xf32>
    %44 = arith.mulf %39, %43 : vector<8x64xf32>
    %45 = vector.broadcast %25 : vector<1x64xf32> to vector<8x64xf32>
    %46 = arith.mulf %44, %45 : vector<8x64xf32>
    %47 = vector.broadcast %26 : vector<1x64xf32> to vector<8x64xf32>
    %48 = arith.addf %46, %47 : vector<8x64xf32>
    %49 = vector.extract_strided_slice %48 {offsets = [7, 0], sizes = [1, 64], strides = [1, 1]} : vector<8x64xf32> to vector<1x64xf32>
    %c0_18 = arith.constant 0 : index
    %c0_19 = arith.constant 0 : index
    %50 = vector.load %arg22[%c0_18, %c0_19] : memref<1x64xf32, #tpu.memory_space<vmem>>, vector<1x64xf32>
    tpu.vector_store %arg22[%c0_18, %c0_19], %49 {strides = array<i32>} : memref<1x64xf32, #tpu.memory_space<vmem>>, vector<1x64xf32>,
    %c0_20 = arith.constant 0 : index
    %c0_21 = arith.constant 0 : index
    %51 = vector.load %arg1[%c0_20, %c0_21] : memref<1x64xf32, #tpu.memory_space<vmem>>, vector<1x64xf32>
    %52 = vector.extract_strided_slice %48 {offsets = [0, 0], sizes = [7, 64], strides = [1, 1]} : vector<8x64xf32> to vector<7x64xf32>
    %53 = tpu.concatenate %51, %52 in 0 : vector<1x64xf32>, vector<7x64xf32> -> vector<8x64xf32>
    %54 = arith.subf %48, %53 : vector<8x64xf32>
    %55 = tpu.concatenate %53, %54 in 1 : vector<8x64xf32>, vector<8x64xf32> -> vector<8x128xf32>
    %56 = arith.truncf %55 : vector<8x128xf32> to vector<8x128xbf16>
    %c0_22 = arith.constant 0 : index
    %c0_23 = arith.constant 0 : index
    %57 = vector.load %arg15[%c0_22, %c0_23] : memref<128x256xbf16, #tpu.memory_space<vmem>>, vector<128x256xbf16>
    %cst_24 = arith.constant dense<0.000000e+00> : vector<8x256xf32>
    %58 = tpu.matmul %56, %57, %cst_24 {dimension_numbers = #tpu.dot_dimension_numbers<[1], [0], [0], [1], [0, 0, 1, 1], [], []>} : vector<8x128xbf16>, vector<128x256xbf16>, vector<8x256xf32> -> vector<8x256xf32>
    %59 = vector.extract_strided_slice %58 {offsets = [0, 0], sizes = [8, 64], strides = [1, 1]} : vector<8x256xf32> to vector<8x64xf32>
    %c0_25 = arith.constant 0 : index
    %c0_26 = arith.constant 0 : index
    %60 = vector.load %arg25[%c0_25, %c0_26] : memref<8x64xf32, #tpu.memory_space<vmem>>, vector<8x64xf32>
    tpu.vector_store %arg25[%c0_25, %c0_26], %59 {strides = array<i32>} : memref<8x64xf32, #tpu.memory_space<vmem>>, vector<8x64xf32>,
    %61 = vector.extract_strided_slice %58 {offsets = [0, 64], sizes = [8, 64], strides = [1, 1]} : vector<8x256xf32> to vector<8x64xf32>
    %c0_27 = arith.constant 0 : index
    %c0_28 = arith.constant 0 : index
    %62 = vector.load %arg26[%c0_27, %c0_28] : memref<8x64xf32, #tpu.memory_space<vmem>>, vector<8x64xf32>
    tpu.vector_store %arg26[%c0_27, %c0_28], %61 {strides = array<i32>} : memref<8x64xf32, #tpu.memory_space<vmem>>, vector<8x64xf32>,
    %63 = vector.extract_strided_slice %58 {offsets = [0, 128], sizes = [8, 64], strides = [1, 1]} : vector<8x256xf32> to vector<8x64xf32>
    %c0_29 = arith.constant 0 : index
    %c0_30 = arith.constant 0 : index
    %64 = vector.load %arg27[%c0_29, %c0_30] : memref<8x64xf32, #tpu.memory_space<vmem>>, vector<8x64xf32>
    tpu.vector_store %arg27[%c0_29, %c0_30], %63 {strides = array<i32>} : memref<8x64xf32, #tpu.memory_space<vmem>>, vector<8x64xf32>,
    %65 = vector.extract_strided_slice %58 {offsets = [0, 192], sizes = [8, 64], strides = [1, 1]} : vector<8x256xf32> to vector<8x64xf32>
    %66 = arith.negf %65 : vector<8x64xf32>
    %67 = math.exp %66 : vector<8x64xf32>
    %cst_31 = arith.constant 1.000000e+00 : f32
    %68 = vector.broadcast %cst_31 : f32 to vector<8x64xf32>
    %69 = arith.addf %68, %67 : vector<8x64xf32>
    %70 = arith.divf %68, %69 : vector<8x64xf32>
    %71 = arith.mulf %65, %70 : vector<8x64xf32>
    %c0_32 = arith.constant 0 : index
    %c0_33 = arith.constant 0 : index
    %72 = vector.load %arg10[%c0_32, %c0_33] : memref<1x64xf32, #tpu.memory_space<vmem>>, vector<1x64xf32>
    %c0_34 = arith.constant 0 : index
    %c0_35 = arith.constant 0 : index
    %73 = vector.load %arg11[%c0_34, %c0_35] : memref<8x64xf32, #tpu.memory_space<vmem>>, vector<8x64xf32>
    %c0_36 = arith.constant 0 : index
    %c0_37 = arith.constant 0 : index
    %74 = vector.load %arg12[%c0_36, %c0_37] : memref<8x64xf32, #tpu.memory_space<vmem>>, vector<8x64xf32>
    %c0_38 = arith.constant 0 : index
    %c0_39 = arith.constant 0 : index
    %75 = vector.load %arg13[%c0_38, %c0_39] : memref<8x64xf32, #tpu.memory_space<vmem>>, vector<8x64xf32>
    %c0_40 = arith.constant 0 : index
    %c0_41 = arith.constant 0 : index
    %76 = vector.load %arg14[%c0_40, %c0_41] : memref<64x1xf32, #tpu.memory_space<vmem>>, vector<64x1xf32>
    %77 = tpu.iota {dimensions = array<i32: 0>} : vector<8x8xi32>
    %78 = tpu.iota {dimensions = array<i32: 1>} : vector<8x8xi32>
    %79 = arith.cmpi sgt, %77, %78 : vector<8x8xi32>
    %80 = arith.extui %79 : vector<8x8xi1> to vector<8x8xi32>
    %81 = arith.sitofp %80 : vector<8x8xi32> to vector<8x8xf32>
    %c0_42 = arith.constant 0 : index
    %c0_43 = arith.constant 0 : index
    %c0_44 = arith.constant 0 : index
    %82 = vector.load %arg2[%c0_42, %c0_43, %c0_44] : memref<1x64x64xf32, #tpu.memory_space<vmem>>, vector<1x64x64xf32>
    %c0_i32 = arith.constant 0 : i32
    %c8_i32 = arith.constant 8 : i32
    %83 = arith.muli %c0_i32, %c8_i32 : i32
    %84 = tpu.assume_multiple %83, 8 : i32
    %85 = arith.index_cast %84 : i32 to index
    %c0_45 = arith.constant 0 : index
    %86 = vector.load %arg25[%85, %c0_45] : memref<8x64xf32, #tpu.memory_space<vmem>>, vector<8x64xf32>
    %87 = arith.index_cast %84 : i32 to index
    %c0_46 = arith.constant 0 : index
    %88 = vector.load %arg26[%87, %c0_46] : memref<8x64xf32, #tpu.memory_space<vmem>>, vector<8x64xf32>
    %89 = arith.index_cast %84 : i32 to index
    %c0_47 = arith.constant 0 : index
    %90 = vector.load %arg27[%89, %c0_47] : memref<8x64xf32, #tpu.memory_space<vmem>>, vector<8x64xf32>
    %91 = vector.shape_cast %82 : vector<1x64x64xf32> to vector<64x64xf32>
    %92 = arith.mulf %86, %73 : vector<8x64xf32>
    %93 = arith.mulf %88, %74 : vector<8x64xf32>
    %cst_48 = arith.constant dense<0.000000e+00> : vector<8x8xf32>
    %94 = tpu.matmul %92, %93, %cst_48 {dimension_numbers = #tpu.dot_dimension_numbers<[1], [1], [0], [0], [0, 0, 1, 0], [], []>} : vector<8x64xf32>, vector<8x64xf32>, vector<8x8xf32> -> vector<8x8xf32>
    %95 = arith.mulf %94, %81 : vector<8x8xf32>
    %96 = vector.broadcast %72 : vector<1x64xf32> to vector<8x64xf32>
    %97 = arith.mulf %86, %96 : vector<8x64xf32>
    %98 = arith.mulf %97, %88 : vector<8x64xf32>
    %cst_49 = arith.constant dense<0.000000e+00> : vector<8xf32>
    %99 = vector.multi_reduction <add>, %98, %cst_49 [1] : vector<8x64xf32> to vector<8xf32>
    %100 = vector.shape_cast %99 : vector<8xf32> to vector<8x1xf32>
    %cst_50 = arith.constant dense<0.000000e+00> : vector<8x64xf32>
    %101 = tpu.matmul %95, %90, %cst_50 {dimension_numbers = #tpu.dot_dimension_numbers<[1], [0], [0], [1], [0, 0, 1, 1], [], []>} : vector<8x8xf32>, vector<8x64xf32>, vector<8x64xf32> -> vector<8x64xf32>
    %102 = vector.broadcast %100 : vector<8x1xf32> to vector<8x64xf32>
    %103 = arith.mulf %102, %90 : vector<8x64xf32>
    %104 = arith.addf %101, %103 : vector<8x64xf32>
    %cst_51 = arith.constant dense<0.000000e+00> : vector<8x64xf32>
    %105 = tpu.matmul %92, %91, %cst_51 {dimension_numbers = #tpu.dot_dimension_numbers<[1], [0], [0], [1], [0, 0, 1, 1], [], []>} : vector<8x64xf32>, vector<64x64xf32>, vector<8x64xf32> -> vector<8x64xf32>
    %106 = arith.addf %104, %105 : vector<8x64xf32>
    %107 = arith.mulf %88, %75 : vector<8x64xf32>
    %108 = vector.broadcast %76 : vector<64x1xf32> to vector<64x64xf32>
    %109 = arith.mulf %91, %108 : vector<64x64xf32>
    %cst_52 = arith.constant dense<0.000000e+00> : vector<64x64xf32>
    %110 = tpu.matmul %107, %90, %cst_52 {dimension_numbers = #tpu.dot_dimension_numbers<[0], [0], [1], [1], [0, 1, 1, 1], [], []>} : vector<8x64xf32>, vector<8x64xf32>, vector<64x64xf32> -> vector<64x64xf32>
    %111 = arith.addf %109, %110 : vector<64x64xf32>
    %112 = arith.index_cast %84 : i32 to index
    %c0_53 = arith.constant 0 : index
    %113 = vector.load %arg28[%112, %c0_53] : memref<8x64xf32, #tpu.memory_space<vmem>>, vector<8x64xf32>
    tpu.vector_store %arg28[%112, %c0_53], %106 {strides = array<i32>} : memref<8x64xf32, #tpu.memory_space<vmem>>, vector<8x64xf32>,
    %114 = vector.shape_cast %111 : vector<64x64xf32> to vector<1x64x64xf32>
    %c1_i32 = arith.constant 1 : i32
    %c0_54 = arith.constant 0 : index
    %c0_55 = arith.constant 0 : index
    %c0_56 = arith.constant 0 : index
    %115 = vector.load %arg23[%c0_54, %c0_55, %c0_56] : memref<1x64x64xf32, #tpu.memory_space<vmem>>, vector<1x64x64xf32>
    tpu.vector_store %arg23[%c0_54, %c0_55, %c0_56], %114 {strides = array<i32>} : memref<1x64x64xf32, #tpu.memory_space<vmem>>, vector<1x64x64xf32>,
    %c0_57 = arith.constant 0 : index
    %c0_58 = arith.constant 0 : index
    %116 = vector.load %arg28[%c0_57, %c0_58] : memref<8x64xf32, #tpu.memory_space<vmem>>, vector<8x64xf32>
    %cst_59 = arith.constant 1.250000e-01 : f32
    %117 = vector.broadcast %cst_59 : f32 to vector<8x64xf32>
    %118 = arith.mulf %116, %117 : vector<8x64xf32>
    %119 = vector.shape_cast %118 : vector<8x64xf32> to vector<8x1x64xf32>
    %cst_60 = arith.constant dense<0.000000e+00> : vector<8x1xf32>
    %120 = vector.multi_reduction <add>, %119, %cst_60 [2] : vector<8x1x64xf32> to vector<8x1xf32>
    %121 = vector.shape_cast %120 : vector<8x1xf32> to vector<8x1x1xf32>
    %cst_61 = arith.constant 6.400000e+01 : f32
    %122 = vector.broadcast %cst_61 : f32 to vector<8x1x1xf32>
    %123 = arith.divf %121, %122 : vector<8x1x1xf32>
    %124 = vector.broadcast %123 : vector<8x1x1xf32> to vector<8x1x64xf32>
    %125 = arith.subf %119, %124 : vector<8x1x64xf32>
    %126 = arith.mulf %125, %125 : vector<8x1x64xf32>
    %cst_62 = arith.constant dense<0.000000e+00> : vector<8x1xf32>
    %127 = vector.multi_reduction <add>, %126, %cst_62 [2] : vector<8x1x64xf32> to vector<8x1xf32>
    %128 = vector.shape_cast %127 : vector<8x1xf32> to vector<8x1x1xf32>
    %cst_63 = arith.constant 6.400000e+01 : f32
    %129 = vector.broadcast %cst_63 : f32 to vector<8x1x1xf32>
    %130 = arith.divf %128, %129 : vector<8x1x1xf32>
    %131 = vector.broadcast %123 : vector<8x1x1xf32> to vector<8x1x64xf32>
    %132 = arith.subf %119, %131 : vector<8x1x64xf32>
    %cst_64 = arith.constant 9.99999974E-6 : f32
    %133 = vector.broadcast %cst_64 : f32 to vector<8x1x1xf32>
    %134 = arith.addf %130, %133 : vector<8x1x1xf32>
    %135 = math.rsqrt %134 : vector<8x1x1xf32>
    %136 = vector.broadcast %135 : vector<8x1x1xf32> to vector<8x1x64xf32>
    %137 = arith.mulf %132, %136 : vector<8x1x64xf32>
    %138 = vector.shape_cast %137 : vector<8x1x64xf32> to vector<8x64xf32>
    %c0_65 = arith.constant 0 : index
    %c0_66 = arith.constant 0 : index
    %139 = vector.load %arg17[%c0_65, %c0_66] : memref<1x64xf32, #tpu.memory_space<vmem>>, vector<1x64xf32>
    %140 = vector.broadcast %139 : vector<1x64xf32> to vector<8x64xf32>
    %141 = arith.mulf %138, %140 : vector<8x64xf32>
    %c0_67 = arith.constant 0 : index
    %c0_68 = arith.constant 0 : index
    %142 = vector.load %arg18[%c0_67, %c0_68] : memref<1x64xf32, #tpu.memory_space<vmem>>, vector<1x64xf32>
    %143 = vector.broadcast %142 : vector<1x64xf32> to vector<8x64xf32>
    %144 = arith.addf %141, %143 : vector<8x64xf32>
    %145 = arith.mulf %144, %71 : vector<8x64xf32>
    %146 = arith.truncf %145 : vector<8x64xf32> to vector<8x64xbf16>
    %c0_69 = arith.constant 0 : index
    %c0_70 = arith.constant 0 : index
    %147 = vector.load %arg16[%c0_69, %c0_70] : memref<64x64xbf16, #tpu.memory_space<vmem>>, vector<64x64xbf16>
    %cst_71 = arith.constant dense<0.000000e+00> : vector<8x64xf32>
    %148 = tpu.matmul %146, %147, %cst_71 {dimension_numbers = #tpu.dot_dimension_numbers<[1], [0], [0], [1], [0, 0, 1, 1], [], []>} : vector<8x64xbf16>, vector<64x64xbf16>, vector<8x64xf32> -> vector<8x64xf32>
    %149 = arith.addf %24, %148 : vector<8x64xf32>
    %c0_72 = arith.constant 0 : index
    %c0_73 = arith.constant 0 : index
    %150 = vector.load %arg8[%c0_72, %c0_73] : memref<1x64xf32, #tpu.memory_space<vmem>>, vector<1x64xf32>
    %c0_74 = arith.constant 0 : index
    %c0_75 = arith.constant 0 : index
    %151 = vector.load %arg9[%c0_74, %c0_75] : memref<1x64xf32, #tpu.memory_space<vmem>>, vector<1x64xf32>
    %cst_76 = arith.constant dense<0.000000e+00> : vector<8xf32>
    %152 = vector.multi_reduction <add>, %149, %cst_76 [1] : vector<8x64xf32> to vector<8xf32>
    %153 = vector.shape_cast %152 : vector<8xf32> to vector<8x1xf32>
    %cst_77 = arith.constant 6.400000e+01 : f32
    %154 = vector.broadcast %cst_77 : f32 to vector<8x1xf32>
    %155 = arith.divf %153, %154 : vector<8x1xf32>
    %156 = vector.broadcast %155 : vector<8x1xf32> to vector<8x64xf32>
    %157 = arith.subf %149, %156 : vector<8x64xf32>
    %158 = arith.mulf %157, %157 : vector<8x64xf32>
    %cst_78 = arith.constant dense<0.000000e+00> : vector<8xf32>
    %159 = vector.multi_reduction <add>, %158, %cst_78 [1] : vector<8x64xf32> to vector<8xf32>
    %160 = vector.shape_cast %159 : vector<8xf32> to vector<8x1xf32>
    %cst_79 = arith.constant 6.400000e+01 : f32
    %161 = vector.broadcast %cst_79 : f32 to vector<8x1xf32>
    %162 = arith.divf %160, %161 : vector<8x1xf32>
    %163 = vector.broadcast %155 : vector<8x1xf32> to vector<8x64xf32>
    %164 = arith.subf %149, %163 : vector<8x64xf32>
    %cst_80 = arith.constant 9.99999974E-6 : f32
    %165 = vector.broadcast %cst_80 : f32 to vector<8x1xf32>
    %166 = arith.addf %162, %165 : vector<8x1xf32>
    %167 = math.rsqrt %166 : vector<8x1xf32>
    %168 = vector.broadcast %167 : vector<8x1xf32> to vector<8x64xf32>
    %169 = arith.mulf %164, %168 : vector<8x64xf32>
    %170 = vector.broadcast %150 : vector<1x64xf32> to vector<8x64xf32>
    %171 = arith.mulf %169, %170 : vector<8x64xf32>
    %172 = vector.broadcast %151 : vector<1x64xf32> to vector<8x64xf32>
    %173 = arith.addf %171, %172 : vector<8x64xf32>
    %174 = vector.extract_strided_slice %173 {offsets = [7, 0], sizes = [1, 64], strides = [1, 1]} : vector<8x64xf32> to vector<1x64xf32>
    %c0_81 = arith.constant 0 : index
    %c0_82 = arith.constant 0 : index
    %175 = vector.load %arg24[%c0_81, %c0_82] : memref<1x64xf32, #tpu.memory_space<vmem>>, vector<1x64xf32>
    tpu.vector_store %arg24[%c0_81, %c0_82], %174 {strides = array<i32>} : memref<1x64xf32, #tpu.memory_space<vmem>>, vector<1x64xf32>,
    %c0_83 = arith.constant 0 : index
    %c0_84 = arith.constant 0 : index
    %176 = vector.load %arg3[%c0_83, %c0_84] : memref<1x64xf32, #tpu.memory_space<vmem>>, vector<1x64xf32>
    %177 = vector.extract_strided_slice %173 {offsets = [0, 0], sizes = [7, 64], strides = [1, 1]} : vector<8x64xf32> to vector<7x64xf32>
    %178 = tpu.concatenate %176, %177 in 0 : vector<1x64xf32>, vector<7x64xf32> -> vector<8x64xf32>
    %179 = arith.subf %173, %178 : vector<8x64xf32>
    %180 = tpu.concatenate %178, %179 in 1 : vector<8x64xf32>, vector<8x64xf32> -> vector<8x128xf32>
    %181 = arith.truncf %180 : vector<8x128xf32> to vector<8x128xbf16>
    %c0_85 = arith.constant 0 : index
    %c0_86 = arith.constant 0 : index
    %182 = vector.load %arg19[%c0_85, %c0_86] : memref<128x192xbf16, #tpu.memory_space<vmem>>, vector<128x192xbf16>
    %cst_87 = arith.constant dense<0.000000e+00> : vector<8x192xf32>
    %183 = tpu.matmul %181, %182, %cst_87 {dimension_numbers = #tpu.dot_dimension_numbers<[1], [0], [0], [1], [0, 0, 1, 1], [], []>} : vector<8x128xbf16>, vector<128x192xbf16>, vector<8x192xf32> -> vector<8x192xf32>
    %184 = vector.extract_strided_slice %183 {offsets = [0, 0], sizes = [8, 128], strides = [1, 1]} : vector<8x192xf32> to vector<8x128xf32>
    %cst_88 = arith.constant 0.000000e+00 : f32
    %185 = vector.broadcast %cst_88 : f32 to vector<8x128xf32>
    %186 = arith.maximumf %184, %185 : vector<8x128xf32>
    %187 = arith.mulf %186, %186 : vector<8x128xf32>
    %188 = vector.extract_strided_slice %183 {offsets = [0, 128], sizes = [8, 64], strides = [1, 1]} : vector<8x192xf32> to vector<8x64xf32>
    %189 = arith.negf %188 : vector<8x64xf32>
    %190 = math.exp %189 : vector<8x64xf32>
    %cst_89 = arith.constant 1.000000e+00 : f32
    %191 = vector.broadcast %cst_89 : f32 to vector<8x64xf32>
    %192 = arith.addf %191, %190 : vector<8x64xf32>
    %193 = arith.divf %191, %192 : vector<8x64xf32>
    %194 = arith.truncf %187 : vector<8x128xf32> to vector<8x128xbf16>
    %c0_90 = arith.constant 0 : index
    %c0_91 = arith.constant 0 : index
    %195 = vector.load %arg20[%c0_90, %c0_91] : memref<128x64xbf16, #tpu.memory_space<vmem>>, vector<128x64xbf16>
    %cst_92 = arith.constant dense<0.000000e+00> : vector<8x64xf32>
    %196 = tpu.matmul %194, %195, %cst_92 {dimension_numbers = #tpu.dot_dimension_numbers<[1], [0], [0], [1], [0, 0, 1, 1], [], []>} : vector<8x128xbf16>, vector<128x64xbf16>, vector<8x64xf32> -> vector<8x64xf32>
    %197 = arith.mulf %193, %196 : vector<8x64xf32>
    %198 = arith.addf %149, %197 : vector<8x64xf32>
    %c0_93 = arith.constant 0 : index
    %c0_94 = arith.constant 0 : index
    %199 = vector.load %arg21[%c0_93, %c0_94] : memref<8x64xf32, #tpu.memory_space<vmem>>, vector<8x64xf32>
    tpu.vector_store %arg21[%c0_93, %c0_94], %198 {strides = array<i32>} : memref<8x64xf32, #tpu.memory_space<vmem>>, vector<8x64xf32>,
    return
  }
}

</mosaic_0001>

<llo_original>
// kernel: tpu_custom_call.1
$region0: #{tpu_custom_call.1}
  #allocation0 [shape = 'u32[]', space=smem, size = 0x4, offset = 0x4, fixed_abs, tag = 'smem constant byte address 0x4 - core index']
  #allocation1 [shape = 'u32[144,128]{1,0:T(1,128)}', space=vmem, size = 0x12000, scoped, tag = 'internal scratch']
  #allocation2 [shape = 'f32[8,64]{1,0:T(8,128)}', space=vmem, size = 0x1000, scoped, tag = 'scratch operand']
  #allocation3 [shape = 'f32[8,64]{1,0:T(8,128)}', space=vmem, size = 0x1000, scoped, tag = 'scratch operand']
  #allocation4 [shape = 'f32[8,64]{1,0:T(8,128)}', space=vmem, size = 0x1000, scoped, tag = 'scratch operand']
  #allocation5 [shape = 'f32[8,64]{1,0:T(8,128)}', space=vmem, size = 0x1000, scoped, tag = 'scratch operand']
  %s0 = inlined_call_operand.vmem [shape: f32[8,64], index: 0, kind: input, shape index: {}]
  %s1 = inlined_call_operand.vmem [shape: f32[1,64], index: 1, kind: input, shape index: {}]
  %s2 = inlined_call_operand.hbm [shape: f32[1,64,64], index: 2, kind: input, shape index: {}, may-alias: {2,23}]
  %s3 = inlined_call_operand.vmem [shape: f32[1,64], index: 3, kind: input, shape index: {}]
  %s4 = inlined_call_operand.vmem [shape: f32[1,64], index: 4, kind: input, shape index: {}]
  %s5 = inlined_call_operand.vmem [shape: f32[1,64], index: 5, kind: input, shape index: {}]
  %s6 = inlined_call_operand.vmem [shape: f32[1,64], index: 6, kind: input, shape index: {}]
  %s7 = inlined_call_operand.vmem [shape: f32[1,64], index: 7, kind: input, shape index: {}]
  %s8 = inlined_call_operand.vmem [shape: f32[1,64], index: 8, kind: input, shape index: {}]
  %s9 = inlined_call_operand.vmem [shape: f32[1,64], index: 9, kind: input, shape index: {}]
  %s10 = inlined_call_operand.vmem [shape: f32[1,64], index: 10, kind: input, shape index: {}]
  %s11 = inlined_call_operand.vmem [shape: f32[8,64], index: 11, kind: input, shape index: {}]
  %s12 = inlined_call_operand.vmem [shape: f32[8,64], index: 12, kind: input, shape index: {}]
  %s13 = inlined_call_operand.vmem [shape: f32[8,64], index: 13, kind: input, shape index: {}]
  %s14 = inlined_call_operand.vmem [shape: f32[64,1], index: 14, kind: input, shape index: {}]
  %s15 = inlined_call_operand.vmem [shape: bf16[128,256], index: 15, kind: input, shape index: {}]
  %s16 = inlined_call_operand.vmem [shape: bf16[64,64], index: 16, kind: input, shape index: {}]
  %s17 = inlined_call_operand.vmem [shape: f32[1,64], index: 17, kind: input, shape index: {}]
  %s18 = inlined_call_operand.vmem [shape: f32[1,64], index: 18, kind: input, shape index: {}]
  %s19 = inlined_call_operand.vmem [shape: bf16[128,192], index: 19, kind: input, shape index: {}]
  %s20 = inlined_call_operand.vmem [shape: bf16[128,64], index: 20, kind: input, shape index: {}]
  %s21 = inlined_call_operand.hbm [shape: f32[8,64], index: 21, kind: output, shape index: {0}]
  %s22 = inlined_call_operand.hbm [shape: f32[1,64], index: 22, kind: output, shape index: {1}]
  %s23 = inlined_call_operand.hbm [shape: f32[1,64,64], index: 23, kind: output, shape index: {2}, may-alias: {2,23}]
  %s24 = inlined_call_operand.hbm [shape: f32[1,64], index: 24, kind: output, shape index: {3}]
  %25 = xla_tuple %s21, %s22, %s23, %s24
  %s26 = sld [smem:[#allocation0]]
  $region122: #{tpu_custom_call.1} parent=0
    _
  %s28 = ssub.s32 1, %s26
  %s29 = scalar_select 0, %s28, %s26
  $region1: #{tpu_custom_call.1} parent=0
    #allocation6 [shape = 'u8[32768]{0}', space=vmem, size = 0x8000, scoped, tag = 'input window, operand 2, single buffered']
    #allocation7 [shape = 's32[1]{0}', space=sflag, size = 0x4, scoped, tag = 'scoped memory for tpu_custom_call.1']
    #allocation8 [shape = 's32[1]{0}', space=sflag, size = 0x4, scoped, tag = 'scoped memory for tpu_custom_call.1']
    #allocation9 [shape = 'u8[4096]{0}', space=vmem, size = 0x1000, scoped, tag = 'output window, operand 0, single buffered']
    #allocation10 [shape = 'u8[512]{0}', space=vmem, size = 0x400, scoped, tag = 'output window, operand 1, single buffered']
    #allocation11 [shape = 's32[1]{0}', space=sflag, size = 0x4, scoped, tag = 'scoped memory for tpu_custom_call.1']
    #allocation12 [shape = 'u8[32768]{0}', space=vmem, size = 0x8000, scoped, tag = 'output window, operand 2, single buffered']
    #allocation13 [shape = 'u8[512]{0}', space=vmem, size = 0x400, scoped, tag = 'output window, operand 3, single buffered']
    #allocation14 [shape = 's32[1]{0}', space=sflag, size = 0x4, scoped, tag = 'scoped memory for tpu_custom_call.1']
    %30 = vsyncpa [#allocation7], 0
    %31 = vsyncpa [#allocation8], 0
    %32 = vsyncpa [#allocation11], 0
    %33 = vsyncpa [#allocation14], 0
    // Predicated region
    $region2: #{tpu_custom_call.1} parent=1 // pred_check
      _
    $region3: #{tpu_custom_call.1} parent=1 // pred_check_branch
      %35 = sbr.rel (0) target = $region5
    $region4: #{tpu_custom_call.1} parent=1 // pred_region
      _
    $region5: #{tpu_custom_call.1} parent=1 // pred_fallthru
      _
    // Predicated region
    $region6: #{tpu_custom_call.1} parent=1 // pred_check
      _
    $region7: #{tpu_custom_call.1} parent=1 // pred_check_branch
      %37 = sbr.rel (0) target = $region9
    $region8: #{tpu_custom_call.1} parent=1 // pred_region
      _
    $region9: #{tpu_custom_call.1} parent=1 // pred_fallthru
      _
    // Predicated region
    $region10: #{tpu_custom_call.1} parent=1 // pred_check
      _
    $region11: #{tpu_custom_call.1} parent=1 // pred_check_branch
      %39 = sbr.rel (0) target = $region13
    $region12: #{tpu_custom_call.1} parent=1 // pred_region
      %s41 = ssub.s32 1024, 1024
      %42 = vsyncadd [#allocation7], %s41
      %s43 = sshll.u32 [#allocation6], 4
      %s44 = int_to_ptr.vmem [resolvable:$true] %s43
      %49 = dma.hbm_to_vmem [thread:$0]  %s2, 1024, %s44, [#allocation7], 128, 128, 8
    $region13: #{tpu_custom_call.1} parent=1 // pred_fallthru
      _
    // Predicated region
    $region14: #{tpu_custom_call.1} parent=1 // pred_check
      _
    $region15: #{tpu_custom_call.1} parent=1 // pred_check_branch
      %51 = sbr.rel (0) target = $region17
    $region16: #{tpu_custom_call.1} parent=1 // pred_region
      _
    $region17: #{tpu_custom_call.1} parent=1 // pred_fallthru
      _
    // Predicated region
    $region18: #{tpu_custom_call.1} parent=1 // pred_check
      _
    $region19: #{tpu_custom_call.1} parent=1 // pred_check_branch
      %53 = sbr.rel (0) target = $region21
    $region20: #{tpu_custom_call.1} parent=1 // pred_region
      _
    $region21: #{tpu_custom_call.1} parent=1 // pred_fallthru
      _
    // Predicated region
    $region22: #{tpu_custom_call.1} parent=1 // pred_check
      _
    $region23: #{tpu_custom_call.1} parent=1 // pred_check_branch
      %55 = sbr.rel (0) target = $region25
    $region24: #{tpu_custom_call.1} parent=1 // pred_region
      _
    $region25: #{tpu_custom_call.1} parent=1 // pred_fallthru
      _
    // Predicated region
    $region26: #{tpu_custom_call.1} parent=1 // pred_check
      _
    $region27: #{tpu_custom_call.1} parent=1 // pred_check_branch
      %57 = sbr.rel (0) target = $region29
    $region28: #{tpu_custom_call.1} parent=1 // pred_region
      _
    $region29: #{tpu_custom_call.1} parent=1 // pred_fallthru
      _
    // Predicated region
    $region30: #{tpu_custom_call.1} parent=1 // pred_check
      _
    $region31: #{tpu_custom_call.1} parent=1 // pred_check_branch
      %59 = sbr.rel (0) target = $region33
    $region32: #{tpu_custom_call.1} parent=1 // pred_region
      _
    $region33: #{tpu_custom_call.1} parent=1 // pred_fallthru
      _
    // Predicated region
    $region34: #{tpu_custom_call.1} parent=1 // pred_check
      _
    $region35: #{tpu_custom_call.1} parent=1 // pred_check_branch
      %61 = sbr.rel (0) target = $region37
    $region36: #{tpu_custom_call.1} parent=1 // pred_region
      _
    $region37: #{tpu_custom_call.1} parent=1 // pred_fallthru
      _
    // Predicated region
    $region38: #{tpu_custom_call.1} parent=1 // pred_check
      _
    $region39: #{tpu_custom_call.1} parent=1 // pred_check_branch
      %63 = sbr.rel (0) target = $region41
    $region40: #{tpu_custom_call.1} parent=1 // pred_region
      _
    $region41: #{tpu_custom_call.1} parent=1 // pred_fallthru
      _
    // Predicated region
    $region42: #{tpu_custom_call.1} parent=1 // pred_check
      _
    $region43: #{tpu_custom_call.1} parent=1 // pred_check_branch
      %65 = sbr.rel (0) target = $region45
    $region44: #{tpu_custom_call.1} parent=1 // pred_region
      _
    $region45: #{tpu_custom_call.1} parent=1 // pred_fallthru
      _
    // Predicated region
    $region46: #{tpu_custom_call.1} parent=1 // pred_check
      _
    $region47: #{tpu_custom_call.1} parent=1 // pred_check_branch
      %67 = sbr.rel (0) target = $region49
    $region48: #{tpu_custom_call.1} parent=1 // pred_region
      _
    $region49: #{tpu_custom_call.1} parent=1 // pred_fallthru
      _
    // Predicated region
    $region50: #{tpu_custom_call.1} parent=1 // pred_check
      _
    $region51: #{tpu_custom_call.1} parent=1 // pred_check_branch
      %69 = sbr.rel (0) target = $region53
    $region52: #{tpu_custom_call.1} parent=1 // pred_region
      _
    $region53: #{tpu_custom_call.1} parent=1 // pred_fallthru
      _
    // Predicated region
    $region54: #{tpu_custom_call.1} parent=1 // pred_check
      _
    $region55: #{tpu_custom_call.1} parent=1 // pred_check_branch
      %71 = sbr.rel (0) target = $region57
    $region56: #{tpu_custom_call.1} parent=1 // pred_region
      _
    $region57: #{tpu_custom_call.1} parent=1 // pred_fallthru
      _
    // Predicated region
    $region58: #{tpu_custom_call.1} parent=1 // pred_check
      _
    $region59: #{tpu_custom_call.1} parent=1 // pred_check_branch
      %73 = sbr.rel (0) target = $region61
    $region60: #{tpu_custom_call.1} parent=1 // pred_region
      _
    $region61: #{tpu_custom_call.1} parent=1 // pred_fallthru
      _
    // Predicated region
    $region62: #{tpu_custom_call.1} parent=1 // pred_check
      _
    $region63: #{tpu_custom_call.1} parent=1 // pred_check_branch
      %75 = sbr.rel (0) target = $region65
    $region64: #{tpu_custom_call.1} parent=1 // pred_region
      _
    $region65: #{tpu_custom_call.1} parent=1 // pred_fallthru
      _
    // Predicated region
    $region66: #{tpu_custom_call.1} parent=1 // pred_check
      _
    $region67: #{tpu_custom_call.1} parent=1 // pred_check_branch
      %77 = sbr.rel (0) target = $region69
    $region68: #{tpu_custom_call.1} parent=1 // pred_region
      _
    $region69: #{tpu_custom_call.1} parent=1 // pred_fallthru
      _
    // Predicated region
    $region70: #{tpu_custom_call.1} parent=1 // pred_check
      _
    $region71: #{tpu_custom_call.1} parent=1 // pred_check_branch
      %79 = sbr.rel (0) target = $region73
    $region72: #{tpu_custom_call.1} parent=1 // pred_region
      _
    $region73: #{tpu_custom_call.1} parent=1 // pred_fallthru
      _
    // Predicated region
    $region74: #{tpu_custom_call.1} parent=1 // pred_check
      _
    $region75: #{tpu_custom_call.1} parent=1 // pred_check_branch
      %81 = sbr.rel (0) target = $region77
    $region76: #{tpu_custom_call.1} parent=1 // pred_region
      _
    $region77: #{tpu_custom_call.1} parent=1 // pred_fallthru
      _
    // Predicated region
    $region78: #{tpu_custom_call.1} parent=1 // pred_check
      _
    $region79: #{tpu_custom_call.1} parent=1 // pred_check_branch
      %83 = sbr.rel (0) target = $region81
    $region80: #{tpu_custom_call.1} parent=1 // pred_region
      _
    $region81: #{tpu_custom_call.1} parent=1 // pred_fallthru
      _
    // Predicated region
    $region82: #{tpu_custom_call.1} parent=1 // pred_check
      _
    $region83: #{tpu_custom_call.1} parent=1 // pred_check_branch
      %85 = sbr.rel (0) target = $region85
    $region84: #{tpu_custom_call.1} parent=1 // pred_region
      _
    $region85: #{tpu_custom_call.1} parent=1 // pred_fallthru
      _
    // Predicated region
    $region86: #{tpu_custom_call.1} parent=1 // pred_check
      _
    $region87: #{tpu_custom_call.1} parent=1 // pred_check_branch
      %87 = sbr.rel (0) target = $region89
    $region88: #{tpu_custom_call.1} parent=1 // pred_region
      %88 = dma.done [#allocation7], 1024
    $region89: #{tpu_custom_call.1} parent=1 // pred_fallthru
      _
    %v90 = vld [vmem:[%s0] sm:$0xff]
    %v91 = vld [vmem:[%s4] sm:$0x1]
    %v92 = vld [vmem:[%s5] sm:$0x1]
    %vm93 = vcmask 523264
    %v94 = vsel %vm93, %v90, 0.0
    %95 = vadd.xlane.f32.xlu0 %v94
    %v96 = vpop.xlane.xlu0 %95
    %v97 = vrcp.pop 64.0
    %v98 = vmul.f32 %v96, %v97
    %v99 = vsub.f32 %v90, %v98
    %v100 = vmul.f32 %v99, %v99
    %v101 = vsel %vm93, %v100, 0.0
    %102 = vadd.xlane.f32.xlu0 %v101
    %v103 = vpop.xlane.xlu0 %102
    %v104 = vmul.f32 %v103, %v97
    %v105 = vadd.f32 %v104, 1e-05
    %v106 = vrsqrt.pop %v105
    %v107 = vmul.f32 %v99, %v106
    %v109 = vlaneseq
    %v110 = vshrl.u32 %v109, 7
    %v111 = vsub.s32 0, %v110
    %v112 = vrot.slane %v91, %v111
    %v114 = vmul.f32 %v107, %v112
    %v116 = vlaneseq
    %v117 = vshrl.u32 %v116, 7
    %v118 = vsub.s32 0, %v117
    %v119 = vrot.slane %v92, %v118
    %v121 = vadd.f32 %v114, %v119
    %v122 = vld [vmem:[%s6] sm:$0x1]
    %v123 = vld [vmem:[%s7] sm:$0x1]
    %v124 = vsel %vm93, %v121, 0.0
    %125 = vadd.xlane.f32.xlu0 %v124
    %v126 = vpop.xlane.xlu0 %125
    %v127 = vmul.f32 %v126, %v97
    %v128 = vsub.f32 %v121, %v127
    %v129 = vmul.f32 %v128, %v128
    %v130 = vsel %vm93, %v129, 0.0
    %131 = vadd.xlane.f32.xlu0 %v130
    %v132 = vpop.xlane.xlu0 %131
    %v133 = vmul.f32 %v132, %v97
    %v134 = vadd.f32 %v133, 1e-05
    %v135 = vrsqrt.pop %v134
    %v136 = vmul.f32 %v128, %v135
    %v138 = vlaneseq
    %v139 = vshrl.u32 %v138, 7
    %v140 = vsub.s32 0, %v139
    %v141 = vrot.slane %v122, %v140
    %v143 = vmul.f32 %v136, %v141
    %v145 = vlaneseq
    %v146 = vshrl.u32 %v145, 7
    %v147 = vsub.s32 0, %v146
    %v148 = vrot.slane %v123, %v147
    %v150 = vadd.f32 %v143, %v148
    %vm151 = vcmask 523271
    %152 = vst.msk [vmem:[#allocation10 - $0x7] sm:$0x80] %vm151, %v150
    %v153 = vld [vmem:[%s1] sm:$0x1]
    %v155 = vrot.slane %v150, 7
    %vm157 = vcmask 1040384
    %v158 = vsel %vm157, %v153, %v155
    %v159 = vsub.f32 %v150, %v158
    %161 = vrot.lane.b32.xlu0 %v159, 64
    %v162 = vpop.permute.xlu0 %161
    %v164 = vsel %vm93, %v158, %v162
    %v165 = vpack.c.bf16 %v164, %v164
    %v166 = vld [vmem:[%s15] sm:$0xff]
    %v167 = vld [vmem:[%s15 + $0x8] sm:$0xff]
    %v168 = vld [vmem:[%s15 + $0x10] sm:$0xff]
    %v169 = vld [vmem:[%s15 + $0x18] sm:$0xff]
    %v170 = vld [vmem:[%s15 + $0x20] sm:$0xff]
    %v171 = vld [vmem:[%s15 + $0x28] sm:$0xff]
    %v172 = vld [vmem:[%s15 + $0x30] sm:$0xff]
    %v173 = vld [vmem:[%s15 + $0x38] sm:$0xff]
    %v174 = vld [vmem:[%s15 + $0x40] sm:$0xff]
    %v175 = vld [vmem:[%s15 + $0x48] sm:$0xff]
    %v176 = vld [vmem:[%s15 + $0x50] sm:$0xff]
    %v177 = vld [vmem:[%s15 + $0x58] sm:$0xff]
    %v178 = vld [vmem:[%s15 + $0x60] sm:$0xff]
    %v179 = vld [vmem:[%s15 + $0x68] sm:$0xff]
    %v180 = vld [vmem:[%s15 + $0x70] sm:$0xff]
    %v181 = vld [vmem:[%s15 + $0x78] sm:$0xff]
    %v198 = vunpack.c.l.b16 %v166
    %v199 = vunpack.c.h.b16 %v166
    %v200 = vunpack.c.l.b16 %v167
    %v201 = vunpack.c.h.b16 %v167
    %v202 = vunpack.c.l.b16 %v168
    %v203 = vunpack.c.h.b16 %v168
    %v204 = vunpack.c.l.b16 %v169
    %v205 = vunpack.c.h.b16 %v169
    %v206 = vunpack.c.l.b16 %v170
    %v207 = vunpack.c.h.b16 %v170
    %v208 = vunpack.c.l.b16 %v171
    %v209 = vunpack.c.h.b16 %v171
    %v210 = vunpack.c.l.b16 %v172
    %v211 = vunpack.c.h.b16 %v172
    %v212 = vunpack.c.l.b16 %v173
    %v213 = vunpack.c.h.b16 %v173
    %v214 = vunpack.c.l.b16 %v174
    %v215 = vunpack.c.h.b16 %v174
    %v216 = vunpack.c.l.b16 %v175
    %v217 = vunpack.c.h.b16 %v175
    %v218 = vunpack.c.l.b16 %v176
    %v219 = vunpack.c.h.b16 %v176
    %v220 = vunpack.c.l.b16 %v177
    %v221 = vunpack.c.h.b16 %v177
    %v222 = vunpack.c.l.b16 %v178
    %v223 = vunpack.c.h.b16 %v178
    %v224 = vunpack.c.l.b16 %v179
    %v225 = vunpack.c.h.b16 %v179
    %v226 = vunpack.c.l.b16 %v180
    %v227 = vunpack.c.h.b16 %v180
    %v228 = vunpack.c.l.b16 %v181
    %v229 = vunpack.c.h.b16 %v181
    %v230 = vpack.c.b16 %v200, %v198
    %v231 = vpack.c.b16 %v201, %v199
    %v232 = vpack.c.b16 %v204, %v202
    %v233 = vpack.c.b16 %v205, %v203
    %v234 = vpack.c.b16 %v208, %v206
    %v235 = vpack.c.b16 %v209, %v207
    %v236 = vpack.c.b16 %v212, %v210
    %v237 = vpack.c.b16 %v213, %v211
    %v238 = vpack.c.b16 %v216, %v214
    %v239 = vpack.c.b16 %v217, %v215
    %v240 = vpack.c.b16 %v220, %v218
    %v241 = vpack.c.b16 %v221, %v219
    %v242 = vpack.c.b16 %v224, %v222
    %v243 = vpack.c.b16 %v225, %v223
    %v244 = vpack.c.b16 %v228, %v226
    %v245 = vpack.c.b16 %v229, %v227
    %262 = vmatprep.subr.bf16.mxu0 %v231
    %263 = vmatpush1.bf16.msra.mxu0 %v230
    %264 = vmatprep.subr.bf16.mxu0 %v233
    %265 = vmatpush1.bf16.msra.mxu0 %v232
    %266 = vmatprep.subr.bf16.mxu0 %v235
    %267 = vmatpush1.bf16.msra.mxu0 %v234
    %268 = vmatprep.subr.bf16.mxu0 %v237
    %269 = vmatpush1.bf16.msra.mxu0 %v236
    %270 = vmatprep.subr.bf16.mxu0 %v239
    %271 = vmatpush1.bf16.msra.mxu0 %v238
    %272 = vmatprep.subr.bf16.mxu0 %v241
    %273 = vmatpush1.bf16.msra.mxu0 %v240
    %274 = vmatprep.subr.bf16.mxu0 %v243
    %275 = vmatpush1.bf16.msra.mxu0 %v242
    %276 = vmatprep.subr.bf16.mxu0 %v245
    %277 = vmatpush1.bf16.msra.mxu0 %v244
    %278 = vmatprep.subr.bf16.mxu0 0
    %279 = vmatpush1.bf16.msra.mxu0 0
    %280 = vmatprep.subr.bf16.mxu0 0
    %281 = vmatpush1.bf16.msra.mxu0 0
    %282 = vmatprep.subr.bf16.mxu0 0
    %283 = vmatpush1.bf16.msra.mxu0 0
    %284 = vmatprep.subr.bf16.mxu0 0
    %285 = vmatpush1.bf16.msra.mxu0 0
    %286 = vmatprep.subr.bf16.mxu0 0
    %287 = vmatpush1.bf16.msra.mxu0 0
    %288 = vmatprep.subr.bf16.mxu0 0
    %289 = vmatpush1.bf16.msra.mxu0 0
    %290 = vmatprep.subr.bf16.mxu0 0
    %291 = vmatpush1.bf16.msra.mxu0 0
    %292 = vmatprep.subr.bf16.mxu0 0
    %293 = vmatpush1.bf16.msra.mxu0 0
    %294 = vmatprep.mubr.bf16.mxu0 0
    %295 = vmatmul.mubr.bf16.gmra.mrb[0].mxu0 %v165
    %v296 = vpop.f32.mrb[0].mxu0
    %v297 = vadd.f32 0.0, %v296
    %v298 = vpop.f32.mrb[0].mxu0
    %v299 = vadd.f32 0.0, %v298
    %v300 = vpop.f32.mrb[0].mxu0
    %v301 = vpop.f32.mrb[0].mxu0
    %302 = vdwg.mxu0
    %303 = vst.msk [vmem:[#allocation2] sm:$0xff] %vm93, %v297
    %305 = vrot.lane.b32.xlu0 %v297, 64
    %v306 = vpop.permute.xlu0 %305
    %308 = vst.msk [vmem:[#allocation3] sm:$0xff] %vm93, %v306
    %309 = vst.msk [vmem:[#allocation4] sm:$0xff] %vm93, %v299
    %v310 = vxor.u32 %v299, 2147483648
    %v311 = vmul.f32 %v310, 1.442695
    %v312 = vpow.pop %v311
    %v313 = vadd.f32 %v312, 1.0
    %v314 = vrcp.pop %v313
    %v315 = vmul.f32 1.0, %v314
    %v316 = vmul.f32 %v299, %v315
    %v317 = vld [vmem:[%s10] sm:$0x1]
    %v318 = vld [vmem:[%s11] sm:$0xff]
    %v319 = vld [vmem:[%s12] sm:$0xff]
    %v320 = vld [vmem:[%s13] sm:$0xff]
    %v321 = vld [vmem:[%s14] sm:$0xff]
    %v322 = vld [vmem:[%s14 + $0x8] sm:$0xff]
    %v323 = vld [vmem:[%s14 + $0x10] sm:$0xff]
    %v324 = vld [vmem:[%s14 + $0x18] sm:$0xff]
    %v325 = vld [vmem:[%s14 + $0x20] sm:$0xff]
    %v326 = vld [vmem:[%s14 + $0x28] sm:$0xff]
    %v327 = vld [vmem:[%s14 + $0x30] sm:$0xff]
    %v328 = vld [vmem:[%s14 + $0x38] sm:$0xff]
    %v329 = vlaneseq
    %v330 = vshrl.u32 %v329, 7
    %v331 = vlaneseq
    %v332 = vand.u32 %v331, 127
    %vm333 = vcmp.gt.s32.totalorder %v330, %v332
    %v334 = vsel %vm333, 1, 0
    %v335 = vcvt.s32.f32 %v334
    %v336 = vld [vmem:[#allocation6] sm:$0xff]
    %v337 = vld [vmem:[#allocation6 + $0x8] sm:$0xff]
    %v338 = vld [vmem:[#allocation6 + $0x10] sm:$0xff]
    %v339 = vld [vmem:[#allocation6 + $0x18] sm:$0xff]
    %v340 = vld [vmem:[#allocation6 + $0x20] sm:$0xff]
    %v341 = vld [vmem:[#allocation6 + $0x28] sm:$0xff]
    %v342 = vld [vmem:[#allocation6 + $0x30] sm:$0xff]
    %v343 = vld [vmem:[#allocation6 + $0x38] sm:$0xff]
    %v344 = vld [vmem:[#allocation2] sm:$0xff]
    %v345 = vld [vmem:[#allocation3] sm:$0xff]
    %v346 = vld [vmem:[#allocation4] sm:$0xff]
    %v347 = vmul.f32 %v344, %v318
    %v348 = vmul.f32 %v345, %v319
    %v350 = vsel %vm93, %v347, 0
    %v353 = vsel %vm93, %v348, 0
    %355 = vmatprep.subr.mxu0 0.0
    %356 = vmatpush1.xpose.msra.mxu0 %v353
    %357 = vmatprep.subr.mxu0 0.0
    %358 = vmatpush1.xpose.msra.mxu0 0.0
    %359 = vmatprep.subr.mxu0 0.0
    %360 = vmatpush1.xpose.msra.mxu0 0.0
    %361 = vmatprep.subr.mxu0 0.0
    %362 = vmatpush1.xpose.msra.mxu0 0.0
    %363 = vmatprep.subr.mxu0 0.0
    %364 = vmatpush1.xpose.msra.mxu0 0.0
    %365 = vmatprep.subr.mxu0 0.0
    %366 = vmatpush1.xpose.msra.mxu0 0.0
    %367 = vmatprep.subr.mxu0 0.0
    %368 = vmatpush1.xpose.msra.mxu0 0.0
    %369 = vmatprep.subr.mxu0 0.0
    %370 = vmatpush1.xpose.msra.mxu0 0.0
    %371 = vmatprep.subr.mxu0 0.0
    %372 = vmatpush1.xpose.msra.mxu0 0.0
    %373 = vmatprep.subr.mxu0 0.0
    %374 = vmatpush1.xpose.msra.mxu0 0.0
    %375 = vmatprep.subr.mxu0 0.0
    %376 = vmatpush1.xpose.msra.mxu0 0.0
    %377 = vmatprep.subr.mxu0 0.0
    %378 = vmatpush1.xpose.msra.mxu0 0.0
    %379 = vmatprep.subr.mxu0 0.0
    %380 = vmatpush1.xpose.msra.mxu0 0.0
    %381 = vmatprep.subr.mxu0 0.0
    %382 = vmatpush1.xpose.msra.mxu0 0.0
    %383 = vmatprep.subr.mxu0 0.0
    %384 = vmatpush1.xpose.msra.mxu0 0.0
    %385 = vmatprep.subr.mxu0 0.0
    %386 = vmatpush1.xpose.msra.mxu0 0.0
    %387 = vmatprep.subr.mxu0 0.0
    %388 = vmatpush1.xpose.msra.mxu0 0.0
    %389 = vmatprep.subr.mxu0 0.0
    %390 = vmatpush1.xpose.msra.mxu0 0.0
    %391 = vmatprep.subr.mxu0 0.0
    %392 = vmatpush1.xpose.msra.mxu0 0.0
    %393 = vmatprep.subr.mxu0 0.0
    %394 = vmatpush1.xpose.msra.mxu0 0.0
    %395 = vmatprep.subr.mxu0 0.0
    %396 = vmatpush1.xpose.msra.mxu0 0.0
    %397 = vmatprep.subr.mxu0 0.0
    %398 = vmatpush1.xpose.msra.mxu0 0.0
    %399 = vmatprep.subr.mxu0 0.0
    %400 = vmatpush1.xpose.msra.mxu0 0.0
    %401 = vmatprep.subr.mxu0 0.0
    %402 = vmatpush1.xpose.msra.mxu0 0.0
    %403 = vmatprep.subr.mxu0 0.0
    %404 = vmatpush1.xpose.msra.mxu0 0.0
    %405 = vmatprep.subr.mxu0 0.0
    %406 = vmatpush1.xpose.msra.mxu0 0.0
    %407 = vmatprep.subr.mxu0 0.0
    %408 = vmatpush1.xpose.msra.mxu0 0.0
    %409 = vmatprep.subr.mxu0 0.0
    %410 = vmatpush1.xpose.msra.mxu0 0.0
    %411 = vmatprep.subr.mxu0 0.0
    %412 = vmatpush1.xpose.msra.mxu0 0.0
    %413 = vmatprep.subr.mxu0 0.0
    %414 = vmatpush1.xpose.msra.mxu0 0.0
    %415 = vmatprep.subr.mxu0 0.0
    %416 = vmatpush1.xpose.msra.mxu0 0.0
    %417 = vmatprep.subr.mxu0 0.0
    %418 = vmatpush1.xpose.msra.mxu0 0.0
    %419 = vmatprep.mubr.f32.mxu0 0.0
    %420 = vmatmul.mubr.f32.gmra.mrb[0].mxu0 %v350
    %v421 = vpop.f32.mrb[0].mxu0
    %v422 = vadd.f32 0.0, %v421
    %v423 = vpop.f32.mrb[0].mxu0
    %424 = vdwg.mxu0
    %v425 = vmul.f32 %v422, %v335
    %v427 = vlaneseq
    %v428 = vshrl.u32 %v427, 7
    %v429 = vsub.s32 0, %v428
    %v430 = vrot.slane %v317, %v429
    %v432 = vmul.f32 %v344, %v430
    %v433 = vmul.f32 %v432, %v345
    %v434 = vsel %vm93, %v433, 0.0
    %435 = vadd.xlane.f32.xlu0 %v434
    %v436 = vpop.xlane.xlu0 %435
    %v437 = vmul.f32 %v436, %v346
    %vm438 = vcmask 64512
    %v440 = vsel %vm438, %v425, 0
    %442 = vmatprep.subr.mxu0 0.0
    %443 = vmatpush1.msra.mxu0 %v346
    %444 = vmatprep.subr.mxu0 0.0
    %445 = vmatpush1.msra.mxu0 0.0
    %446 = vmatprep.subr.mxu0 0.0
    %447 = vmatpush1.msra.mxu0 0.0
    %448 = vmatprep.subr.mxu0 0.0
    %449 = vmatpush1.msra.mxu0 0.0
    %450 = vmatprep.subr.mxu0 0.0
    %451 = vmatpush1.msra.mxu0 0.0
    %452 = vmatprep.subr.mxu0 0.0
    %453 = vmatpush1.msra.mxu0 0.0
    %454 = vmatprep.subr.mxu0 0.0
    %455 = vmatpush1.msra.mxu0 0.0
    %456 = vmatprep.subr.mxu0 0.0
    %457 = vmatpush1.msra.mxu0 0.0
    %458 = vmatprep.subr.mxu0 0.0
    %459 = vmatpush1.msra.mxu0 0.0
    %460 = vmatprep.subr.mxu0 0.0
    %461 = vmatpush1.msra.mxu0 0.0
    %462 = vmatprep.subr.mxu0 0.0
    %463 = vmatpush1.msra.mxu0 0.0
    %464 = vmatprep.subr.mxu0 0.0
    %465 = vmatpush1.msra.mxu0 0.0
    %466 = vmatprep.subr.mxu0 0.0
    %467 = vmatpush1.msra.mxu0 0.0
    %468 = vmatprep.subr.mxu0 0.0
    %469 = vmatpush1.msra.mxu0 0.0
    %470 = vmatprep.subr.mxu0 0.0
    %471 = vmatpush1.msra.mxu0 0.0
    %472 = vmatprep.subr.mxu0 0.0
    %473 = vmatpush1.msra.mxu0 0.0
    %474 = vmatprep.subr.mxu0 0.0
    %475 = vmatpush1.msra.mxu0 0.0
    %476 = vmatprep.subr.mxu0 0.0
    %477 = vmatpush1.msra.mxu0 0.0
    %478 = vmatprep.subr.mxu0 0.0
    %479 = vmatpush1.msra.mxu0 0.0
    %480 = vmatprep.subr.mxu0 0.0
    %481 = vmatpush1.msra.mxu0 0.0
    %482 = vmatprep.subr.mxu0 0.0
    %483 = vmatpush1.msra.mxu0 0.0
    %484 = vmatprep.subr.mxu0 0.0
    %485 = vmatpush1.msra.mxu0 0.0
    %486 = vmatprep.subr.mxu0 0.0
    %487 = vmatpush1.msra.mxu0 0.0
    %488 = vmatprep.subr.mxu0 0.0
    %489 = vmatpush1.msra.mxu0 0.0
    %490 = vmatprep.subr.mxu0 0.0
    %491 = vmatpush1.msra.mxu0 0.0
    %492 = vmatprep.subr.mxu0 0.0
    %493 = vmatpush1.msra.mxu0 0.0
    %494 = vmatprep.subr.mxu0 0.0
    %495 = vmatpush1.msra.mxu0 0.0
    %496 = vmatprep.subr.mxu0 0.0
    %497 = vmatpush1.msra.mxu0 0.0
    %498 = vmatprep.subr.mxu0 0.0
    %499 = vmatpush1.msra.mxu0 0.0
    %500 = vmatprep.subr.mxu0 0.0
    %501 = vmatpush1.msra.mxu0 0.0
    %502 = vmatprep.subr.mxu0 0.0
    %503 = vmatpush1.msra.mxu0 0.0
    %504 = vmatprep.subr.mxu0 0.0
    %505 = vmatpush1.msra.mxu0 0.0
    %506 = vmatprep.mubr.f32.mxu0 0.0
    %507 = vmatmul.mubr.f32.gmra.mrb[0].mxu0 %v440
    %v508 = vpop.f32.mrb[0].mxu0
    %v509 = vadd.f32 %v437, %v508
    %v510 = vpop.f32.mrb[0].mxu0
    %511 = vdwg.mxu0
    %512 = vmatprep.subr.mxu0 0.0
    %513 = vmatpush1.msra.mxu0 %v336
    %514 = vmatprep.subr.mxu0 0.0
    %515 = vmatpush1.msra.mxu0 %v337
    %516 = vmatprep.subr.mxu0 0.0
    %517 = vmatpush1.msra.mxu0 %v338
    %518 = vmatprep.subr.mxu0 0.0
    %519 = vmatpush1.msra.mxu0 %v339
    %520 = vmatprep.subr.mxu0 0.0
    %521 = vmatpush1.msra.mxu0 %v340
    %522 = vmatprep.subr.mxu0 0.0
    %523 = vmatpush1.msra.mxu0 %v341
    %524 = vmatprep.subr.mxu0 0.0
    %525 = vmatpush1.msra.mxu0 %v342
    %526 = vmatprep.subr.mxu0 0.0
    %527 = vmatpush1.msra.mxu0 %v343
    %528 = vmatprep.subr.mxu0 0.0
    %529 = vmatpush1.msra.mxu0 0.0
    %530 = vmatprep.subr.mxu0 0.0
    %531 = vmatpush1.msra.mxu0 0.0
    %532 = vmatprep.subr.mxu0 0.0
    %533 = vmatpush1.msra.mxu0 0.0
    %534 = vmatprep.subr.mxu0 0.0
    %535 = vmatpush1.msra.mxu0 0.0
    %536 = vmatprep.subr.mxu0 0.0
    %537 = vmatpush1.msra.mxu0 0.0
    %538 = vmatprep.subr.mxu0 0.0
    %539 = vmatpush1.msra.mxu0 0.0
    %540 = vmatprep.subr.mxu0 0.0
    %541 = vmatpush1.msra.mxu0 0.0
    %542 = vmatprep.subr.mxu0 0.0
    %543 = vmatpush1.msra.mxu0 0.0
    %544 = vmatprep.subr.mxu0 0.0
    %545 = vmatpush1.msra.mxu0 0.0
    %546 = vmatprep.subr.mxu0 0.0
    %547 = vmatpush1.msra.mxu0 0.0
    %548 = vmatprep.subr.mxu0 0.0
    %549 = vmatpush1.msra.mxu0 0.0
    %550 = vmatprep.subr.mxu0 0.0
    %551 = vmatpush1.msra.mxu0 0.0
    %552 = vmatprep.subr.mxu0 0.0
    %553 = vmatpush1.msra.mxu0 0.0
    %554 = vmatprep.subr.mxu0 0.0
    %555 = vmatpush1.msra.mxu0 0.0
    %556 = vmatprep.subr.mxu0 0.0
    %557 = vmatpush1.msra.mxu0 0.0
    %558 = vmatprep.subr.mxu0 0.0
    %559 = vmatpush1.msra.mxu0 0.0
    %560 = vmatprep.subr.mxu0 0.0
    %561 = vmatpush1.msra.mxu0 0.0
    %562 = vmatprep.subr.mxu0 0.0
    %563 = vmatpush1.msra.mxu0 0.0
    %564 = vmatprep.subr.mxu0 0.0
    %565 = vmatpush1.msra.mxu0 0.0
    %566 = vmatprep.subr.mxu0 0.0
    %567 = vmatpush1.msra.mxu0 0.0
    %568 = vmatprep.subr.mxu0 0.0
    %569 = vmatpush1.msra.mxu0 0.0
    %570 = vmatprep.subr.mxu0 0.0
    %571 = vmatpush1.msra.mxu0 0.0
    %572 = vmatprep.subr.mxu0 0.0
    %573 = vmatpush1.msra.mxu0 0.0
    %574 = vmatprep.subr.mxu0 0.0
    %575 = vmatpush1.msra.mxu0 0.0
    %576 = vmatprep.mubr.f32.mxu0 0.0
    %577 = vmatmul.mubr.f32.gmra.mrb[0].mxu0 %v350
    %v578 = vpop.f32.mrb[0].mxu0
    %v579 = vadd.f32 0.0, %v578
    %v580 = vpop.f32.mrb[0].mxu0
    %581 = vdwg.mxu0
    %v582 = vadd.f32 %v509, %v579
    %v583 = vmul.f32 %v345, %v320
    %585 = vset.pattern.permute.xlu0 0
    %586 = vperm.xlu0 %585, %v321
    %v587 = vpop.permute.xlu0 %586
    %590 = vset.pattern.permute.xlu0 0
    %591 = vperm.xlu0 %590, %v322
    %v592 = vpop.permute.xlu0 %591
    %595 = vset.pattern.permute.xlu0 0
    %596 = vperm.xlu0 %595, %v323
    %v597 = vpop.permute.xlu0 %596
    %600 = vset.pattern.permute.xlu0 0
    %601 = vperm.xlu0 %600, %v324
    %v602 = vpop.permute.xlu0 %601
    %605 = vset.pattern.permute.xlu0 0
    %606 = vperm.xlu0 %605, %v325
    %v607 = vpop.permute.xlu0 %606
    %610 = vset.pattern.permute.xlu0 0
    %611 = vperm.xlu0 %610, %v326
    %v612 = vpop.permute.xlu0 %611
    %615 = vset.pattern.permute.xlu0 0
    %616 = vperm.xlu0 %615, %v327
    %v617 = vpop.permute.xlu0 %616
    %620 = vset.pattern.permute.xlu0 0
    %621 = vperm.xlu0 %620, %v328
    %v622 = vpop.permute.xlu0 %621
    %v624 = vmul.f32 %v336, %v587
    %v625 = vmul.f32 %v337, %v592
    %v626 = vmul.f32 %v338, %v597
    %v627 = vmul.f32 %v339, %v602
    %v628 = vmul.f32 %v340, %v607
    %v629 = vmul.f32 %v341, %v612
    %v630 = vmul.f32 %v342, %v617
    %v631 = vmul.f32 %v343, %v622
    %632 = vxpose.xlu0.b32.start [1/16] %v583, 128
    %633 = vxpose.xlu0.b32.cont [2/16] 0.0, 128
    %634 = vxpose.xlu0.b32.cont [3/16] 0.0, 128
    %635 = vxpose.xlu0.b32.cont [4/16] 0.0, 128
    %636 = vxpose.xlu0.b32.cont [5/16] 0.0, 128
    %637 = vxpose.xlu0.b32.cont [6/16] 0.0, 128
    %638 = vxpose.xlu0.b32.cont [7/16] 0.0, 128
    %639 = vxpose.xlu0.b32.cont [8/16] 0.0, 128
    %640 = vxpose.xlu0.b32.cont [9/16] 0.0, 128
    %641 = vxpose.xlu0.b32.cont [10/16] 0.0, 128
    %642 = vxpose.xlu0.b32.cont [11/16] 0.0, 128
    %643 = vxpose.xlu0.b32.cont [12/16] 0.0, 128
    %644 = vxpose.xlu0.b32.cont [13/16] 0.0, 128
    %645 = vxpose.xlu0.b32.cont [14/16] 0.0, 128
    %646 = vxpose.xlu0.b32.cont [15/16] 0.0, 128
    %647 = vxpose.xlu0.b32.end [16/16] 0.0, 128
    %v648 = vpop.trf.xlu0
    %v649 = vpop.trf.xlu0
    %v650 = vpop.trf.xlu0
    %v651 = vpop.trf.xlu0
    %v652 = vpop.trf.xlu0
    %v653 = vpop.trf.xlu0
    %v654 = vpop.trf.xlu0
    %v655 = vpop.trf.xlu0
    %v656 = vpop.trf.xlu0
    %v657 = vpop.trf.xlu0
    %v658 = vpop.trf.xlu0
    %v659 = vpop.trf.xlu0
    %v660 = vpop.trf.xlu0
    %v661 = vpop.trf.xlu0
    %v662 = vpop.trf.xlu0
    %v663 = vpop.trf.xlu0
    %v665 = vsel %vm438, %v648, 0
    %v668 = vsel %vm438, %v649, 0
    %v671 = vsel %vm438, %v650, 0
    %v674 = vsel %vm438, %v651, 0
    %v677 = vsel %vm438, %v652, 0
    %v680 = vsel %vm438, %v653, 0
    %v683 = vsel %vm438, %v654, 0
    %v686 = vsel %vm438, %v655, 0
    %688 = vmatprep.subr.mxu0 0.0
    %689 = vmatpush1.msra.mxu0 %v346
    %690 = vmatprep.subr.mxu0 0.0
    %691 = vmatpush1.msra.mxu0 0.0
    %692 = vmatprep.subr.mxu0 0.0
    %693 = vmatpush1.msra.mxu0 0.0
    %694 = vmatprep.subr.mxu0 0.0
    %695 = vmatpush1.msra.mxu0 0.0
    %696 = vmatprep.subr.mxu0 0.0
    %697 = vmatpush1.msra.mxu0 0.0
    %698 = vmatprep.subr.mxu0 0.0
    %699 = vmatpush1.msra.mxu0 0.0
    %700 = vmatprep.subr.mxu0 0.0
    %701 = vmatpush1.msra.mxu0 0.0
    %702 = vmatprep.subr.mxu0 0.0
    %703 = vmatpush1.msra.mxu0 0.0
    %704 = vmatprep.subr.mxu0 0.0
    %705 = vmatpush1.msra.mxu0 0.0
    %706 = vmatprep.subr.mxu0 0.0
    %707 = vmatpush1.msra.mxu0 0.0
    %708 = vmatprep.subr.mxu0 0.0
    %709 = vmatpush1.msra.mxu0 0.0
    %710 = vmatprep.subr.mxu0 0.0
    %711 = vmatpush1.msra.mxu0 0.0
    %712 = vmatprep.subr.mxu0 0.0
    %713 = vmatpush1.msra.mxu0 0.0
    %714 = vmatprep.subr.mxu0 0.0
    %715 = vmatpush1.msra.mxu0 0.0
    %716 = vmatprep.subr.mxu0 0.0
    %717 = vmatpush1.msra.mxu0 0.0
    %718 = vmatprep.subr.mxu0 0.0
    %719 = vmatpush1.msra.mxu0 0.0
    %720 = vmatprep.subr.mxu0 0.0
    %721 = vmatpush1.msra.mxu0 0.0
    %722 = vmatprep.subr.mxu0 0.0
    %723 = vmatpush1.msra.mxu0 0.0
    %724 = vmatprep.subr.mxu0 0.0
    %725 = vmatpush1.msra.mxu0 0.0
    %726 = vmatprep.subr.mxu0 0.0
    %727 = vmatpush1.msra.mxu0 0.0
    %728 = vmatprep.subr.mxu0 0.0
    %729 = vmatpush1.msra.mxu0 0.0
    %730 = vmatprep.subr.mxu0 0.0
    %731 = vmatpush1.msra.mxu0 0.0
    %732 = vmatprep.subr.mxu0 0.0
    %733 = vmatpush1.msra.mxu0 0.0
    %734 = vmatprep.subr.mxu0 0.0
    %735 = vmatpush1.msra.mxu0 0.0
    %736 = vmatprep.subr.mxu0 0.0
    %737 = vmatpush1.msra.mxu0 0.0
    %738 = vmatprep.subr.mxu0 0.0
    %739 = vmatpush1.msra.mxu0 0.0
    %740 = vmatprep.subr.mxu0 0.0
    %741 = vmatpush1.msra.mxu0 0.0
    %742 = vmatprep.subr.mxu0 0.0
    %743 = vmatpush1.msra.mxu0 0.0
    %744 = vmatprep.subr.mxu0 0.0
    %745 = vmatpush1.msra.mxu0 0.0
    %746 = vmatprep.subr.mxu0 0.0
    %747 = vmatpush1.msra.mxu0 0.0
    %748 = vmatprep.subr.mxu0 0.0
    %749 = vmatpush1.msra.mxu0 0.0
    %750 = vmatprep.subr.mxu0 0.0
    %751 = vmatpush1.msra.mxu0 0.0
    %752 = vmatprep.mubr.f32.mxu0 0.0
    %753 = vmatmul.mubr.f32.gmra.mrb[0].mxu0 %v665
    %v754 = vpop.f32.mrb[0].mxu0
    %v755 = vadd.f32 0.0, %v754
    %v756 = vpop.f32.mrb[0].mxu0
    %757 = vmatprep.mubr.f32.mxu0 0.0
    %758 = vmatmul.mubr.f32.gmra.mrb[0].mxu0 %v668
    %v759 = vpop.f32.mrb[0].mxu0
    %v760 = vadd.f32 0.0, %v759
    %v761 = vpop.f32.mrb[0].mxu0
    %762 = vmatprep.mubr.f32.mxu0 0.0
    %763 = vmatmul.mubr.f32.gmra.mrb[0].mxu0 %v671
    %v764 = vpop.f32.mrb[0].mxu0
    %v765 = vadd.f32 0.0, %v764
    %v766 = vpop.f32.mrb[0].mxu0
    %767 = vmatprep.mubr.f32.mxu0 0.0
    %768 = vmatmul.mubr.f32.gmra.mrb[0].mxu0 %v674
    %v769 = vpop.f32.mrb[0].mxu0
    %v770 = vadd.f32 0.0, %v769
    %v771 = vpop.f32.mrb[0].mxu0
    %772 = vmatprep.mubr.f32.mxu0 0.0
    %773 = vmatmul.mubr.f32.gmra.mrb[0].mxu0 %v677
    %v774 = vpop.f32.mrb[0].mxu0
    %v775 = vadd.f32 0.0, %v774
    %v776 = vpop.f32.mrb[0].mxu0
    %777 = vmatprep.mubr.f32.mxu0 0.0
    %778 = vmatmul.mubr.f32.gmra.mrb[0].mxu0 %v680
    %v779 = vpop.f32.mrb[0].mxu0
    %v780 = vadd.f32 0.0, %v779
    %v781 = vpop.f32.mrb[0].mxu0
    %782 = vmatprep.mubr.f32.mxu0 0.0
    %783 = vmatmul.mubr.f32.gmra.mrb[0].mxu0 %v683
    %v784 = vpop.f32.mrb[0].mxu0
    %v785 = vadd.f32 0.0, %v784
    %v786 = vpop.f32.mrb[0].mxu0
    %787 = vmatprep.mubr.f32.mxu0 0.0
    %788 = vmatmul.mubr.f32.gmra.mrb[0].mxu0 %v686
    %v789 = vpop.f32.mrb[0].mxu0
    %v790 = vadd.f32 0.0, %v789
    %v791 = vpop.f32.mrb[0].mxu0
    %792 = vdwg.mxu0
    %v793 = vadd.f32 %v624, %v755
    %v794 = vadd.f32 %v625, %v760
    %v795 = vadd.f32 %v626, %v765
    %v796 = vadd.f32 %v627, %v770
    %v797 = vadd.f32 %v628, %v775
    %v798 = vadd.f32 %v629, %v780
    %v799 = vadd.f32 %v630, %v785
    %v800 = vadd.f32 %v631, %v790
    %801 = vst.msk [vmem:[#allocation5] sm:$0xff] %vm93, %v582
    %802 = vst.msk [vmem:[#allocation12] sm:$0xff] %vm93, %v793
    %803 = vst.msk [vmem:[#allocation12 + $0x8] sm:$0xff] %vm93, %v794
    %804 = vst.msk [vmem:[#allocation12 + $0x10] sm:$0xff] %vm93, %v795
    %805 = vst.msk [vmem:[#allocation12 + $0x18] sm:$0xff] %vm93, %v796
    %806 = vst.msk [vmem:[#allocation12 + $0x20] sm:$0xff] %vm93, %v797
    %807 = vst.msk [vmem:[#allocation12 + $0x28] sm:$0xff] %vm93, %v798
    %808 = vst.msk [vmem:[#allocation12 + $0x30] sm:$0xff] %vm93, %v799
    %809 = vst.msk [vmem:[#allocation12 + $0x38] sm:$0xff] %vm93, %v800
    %v810 = vld [vmem:[#allocation5] sm:$0xff]
    %v811 = vmul.f32 %v810, 0.125
    %v813 = vcombine.high %v811, %v811
    %v815 = vunpack.c.l.s4 1966171168
    %v816 = vunpack.c.0.s8 %v815
    %v817 = vlaneseq
    %v818 = vshrl.u32 %v817, 7
    %v819 = vsub.s32 %v816, %v818
    %v820 = vrot.slane %v811, %v819
    %v822 = vunpack.c.l.s4 1966171168
    %v823 = vunpack.c.0.s8 %v822
    %v824 = vlaneseq
    %v825 = vshrl.u32 %v824, 7
    %v826 = vsub.s32 %v823, %v825
    %v827 = vrot.slane %v813, %v826
    %v828 = vcombine.high %v820, %v820
    %v829 = vcombine.high %v827, %v827
    %v831 = vunpack.c.l.s4 1966171168
    %v832 = vunpack.c.0.s8 %v831
    %v833 = vlaneseq
    %v834 = vshrl.u32 %v833, 7
    %v835 = vsub.s32 %v832, %v834
    %v836 = vrot.slane %v820, %v835
    %v838 = vunpack.c.l.s4 1966171168
    %v839 = vunpack.c.0.s8 %v838
    %v840 = vlaneseq
    %v841 = vshrl.u32 %v840, 7
    %v842 = vsub.s32 %v839, %v841
    %v843 = vrot.slane %v827, %v842
    %v845 = vunpack.c.l.s4 1966171168
    %v846 = vunpack.c.0.s8 %v845
    %v847 = vlaneseq
    %v848 = vshrl.u32 %v847, 7
    %v849 = vsub.s32 %v846, %v848
    %v850 = vrot.slane %v828, %v849
    %v852 = vunpack.c.l.s4 1966171168
    %v853 = vunpack.c.0.s8 %v852
    %v854 = vlaneseq
    %v855 = vshrl.u32 %v854, 7
    %v856 = vsub.s32 %v853, %v855
    %v857 = vrot.slane %v829, %v856
    %v858 = vcombine.high %v836, %v836
    %v859 = vcombine.high %v843, %v843
    %v860 = vcombine.high %v850, %v850
    %v861 = vcombine.high %v857, %v857
    %vm870 = vcmask 516096
    %v871 = vsel %vm870, %v836, 0.0
    %872 = vadd.xlane.f32.xlu0 %v871
    %v873 = vpop.xlane.xlu0 %872
    %v874 = vsel %vm870, %v850, 0.0
    %875 = vadd.xlane.f32.xlu0 %v874
    %v876 = vpop.xlane.xlu0 %875
    %v877 = vsel %vm870, %v858, 0.0
    %878 = vadd.xlane.f32.xlu0 %v877
    %v879 = vpop.xlane.xlu0 %878
    %v880 = vsel %vm870, %v860, 0.0
    %881 = vadd.xlane.f32.xlu0 %v880
    %v882 = vpop.xlane.xlu0 %881
    %v883 = vsel %vm870, %v843, 0.0
    %884 = vadd.xlane.f32.xlu0 %v883
    %v885 = vpop.xlane.xlu0 %884
    %v886 = vsel %vm870, %v857, 0.0
    %887 = vadd.xlane.f32.xlu0 %v886
    %v888 = vpop.xlane.xlu0 %887
    %v889 = vsel %vm870, %v859, 0.0
    %890 = vadd.xlane.f32.xlu0 %v889
    %v891 = vpop.xlane.xlu0 %890
    %v892 = vsel %vm870, %v861, 0.0
    %893 = vadd.xlane.f32.xlu0 %v892
    %v894 = vpop.xlane.xlu0 %893
    %v895 = vmul.f32 %v873, %v97
    %v896 = vmul.f32 %v876, %v97
    %v897 = vmul.f32 %v879, %v97
    %v898 = vmul.f32 %v882, %v97
    %v899 = vmul.f32 %v885, %v97
    %v900 = vmul.f32 %v888, %v97
    %v901 = vmul.f32 %v891, %v97
    %v902 = vmul.f32 %v894, %v97
    %v903 = vsub.f32 %v836, %v895
    %v904 = vsub.f32 %v850, %v896
    %v905 = vsub.f32 %v858, %v897
    %v906 = vsub.f32 %v860, %v898
    %v907 = vsub.f32 %v843, %v899
    %v908 = vsub.f32 %v857, %v900
    %v909 = vsub.f32 %v859, %v901
    %v910 = vsub.f32 %v861, %v902
    %v911 = vmul.f32 %v903, %v903
    %v912 = vmul.f32 %v904, %v904
    %v913 = vmul.f32 %v905, %v905
    %v914 = vmul.f32 %v906, %v906
    %v915 = vmul.f32 %v907, %v907
    %v916 = vmul.f32 %v908, %v908
    %v917 = vmul.f32 %v909, %v909
    %v918 = vmul.f32 %v910, %v910
    %v919 = vsel %vm870, %v911, 0.0
    %920 = vadd.xlane.f32.xlu0 %v919
    %v921 = vpop.xlane.xlu0 %920
    %v922 = vsel %vm870, %v912, 0.0
    %923 = vadd.xlane.f32.xlu0 %v922
    %v924 = vpop.xlane.xlu0 %923
    %v925 = vsel %vm870, %v913, 0.0
    %926 = vadd.xlane.f32.xlu0 %v925
    %v927 = vpop.xlane.xlu0 %926
    %v928 = vsel %vm870, %v914, 0.0
    %929 = vadd.xlane.f32.xlu0 %v928
    %v930 = vpop.xlane.xlu0 %929
    %v931 = vsel %vm870, %v915, 0.0
    %932 = vadd.xlane.f32.xlu0 %v931
    %v933 = vpop.xlane.xlu0 %932
    %v934 = vsel %vm870, %v916, 0.0
    %935 = vadd.xlane.f32.xlu0 %v934
    %v936 = vpop.xlane.xlu0 %935
    %v937 = vsel %vm870, %v917, 0.0
    %938 = vadd.xlane.f32.xlu0 %v937
    %v939 = vpop.xlane.xlu0 %938
    %v940 = vsel %vm870, %v918, 0.0
    %941 = vadd.xlane.f32.xlu0 %v940
    %v942 = vpop.xlane.xlu0 %941
    %v943 = vmul.f32 %v921, %v97
    %v944 = vmul.f32 %v924, %v97
    %v945 = vmul.f32 %v927, %v97
    %v946 = vmul.f32 %v930, %v97
    %v947 = vmul.f32 %v933, %v97
    %v948 = vmul.f32 %v936, %v97
    %v949 = vmul.f32 %v939, %v97
    %v950 = vmul.f32 %v942, %v97
    %v951 = vadd.f32 %v943, 1e-05
    %v952 = vadd.f32 %v944, 1e-05
    %v953 = vadd.f32 %v945, 1e-05
    %v954 = vadd.f32 %v946, 1e-05
    %v955 = vadd.f32 %v947, 1e-05
    %v956 = vadd.f32 %v948, 1e-05
    %v957 = vadd.f32 %v949, 1e-05
    %v958 = vadd.f32 %v950, 1e-05
    %v959 = vrsqrt.pop %v951
    %v960 = vrsqrt.pop %v952
    %v961 = vrsqrt.pop %v953
    %v962 = vrsqrt.pop %v954
    %v963 = vrsqrt.pop %v955
    %v964 = vrsqrt.pop %v956
    %v965 = vrsqrt.pop %v957
    %v966 = vrsqrt.pop %v958
    %v967 = vmul.f32 %v903, %v959
    %v968 = vmul.f32 %v904, %v960
    %v969 = vmul.f32 %v905, %v961
    %v970 = vmul.f32 %v906, %v962
    %v971 = vmul.f32 %v907, %v963
    %v972 = vmul.f32 %v908, %v964
    %v973 = vmul.f32 %v909, %v965
    %v974 = vmul.f32 %v910, %v966
    %v975 = vld [vmem:[%s17] sm:$0x1]
    %v977 = vlaneseq
    %v978 = vshrl.u32 %v977, 7
    %v979 = vsub.s32 0, %v978
    %v980 = vrot.slane %v975, %v979
    %v981 = vcombine.high %v980, %v980
    %v983 = vunpack.c.l.s4 1966171168
    %v984 = vunpack.c.0.s8 %v983
    %v985 = vlaneseq
    %v986 = vshrl.u32 %v985, 7
    %v987 = vsub.s32 %v984, %v986
    %v988 = vrot.slane %v980, %v987
    %v990 = vunpack.c.l.s4 1966171168
    %v991 = vunpack.c.0.s8 %v990
    %v992 = vlaneseq
    %v993 = vshrl.u32 %v992, 7
    %v994 = vsub.s32 %v991, %v993
    %v995 = vrot.slane %v981, %v994
    %v996 = vcombine.high %v988, %v988
    %v997 = vcombine.high %v995, %v995
    %v999 = vunpack.c.l.s4 1966171168
    %v1000 = vunpack.c.0.s8 %v999
    %v1001 = vlaneseq
    %v1002 = vshrl.u32 %v1001, 7
    %v1003 = vsub.s32 %v1000, %v1002
    %v1004 = vrot.slane %v988, %v1003
    %v1006 = vunpack.c.l.s4 1966171168
    %v1007 = vunpack.c.0.s8 %v1006
    %v1008 = vlaneseq
    %v1009 = vshrl.u32 %v1008, 7
    %v1010 = vsub.s32 %v1007, %v1009
    %v1011 = vrot.slane %v995, %v1010
    %v1013 = vunpack.c.l.s4 1966171168
    %v1014 = vunpack.c.0.s8 %v1013
    %v1015 = vlaneseq
    %v1016 = vshrl.u32 %v1015, 7
    %v1017 = vsub.s32 %v1014, %v1016
    %v1018 = vrot.slane %v996, %v1017
    %v1020 = vunpack.c.l.s4 1966171168
    %v1021 = vunpack.c.0.s8 %v1020
    %v1022 = vlaneseq
    %v1023 = vshrl.u32 %v1022, 7
    %v1024 = vsub.s32 %v1021, %v1023
    %v1025 = vrot.slane %v997, %v1024
    %v1026 = vcombine.high %v1004, %v1004
    %v1027 = vcombine.high %v1011, %v1011
    %v1028 = vcombine.high %v1018, %v1018
    %v1029 = vcombine.high %v1025, %v1025
    %v1038 = vmul.f32 %v967, %v1004
    %v1039 = vmul.f32 %v968, %v1018
    %v1040 = vmul.f32 %v969, %v1026
    %v1041 = vmul.f32 %v970, %v1028
    %v1042 = vmul.f32 %v971, %v1011
    %v1043 = vmul.f32 %v972, %v1025
    %v1044 = vmul.f32 %v973, %v1027
    %v1045 = vmul.f32 %v974, %v1029
    %v1046 = vld [vmem:[%s18] sm:$0x1]
    %v1048 = vlaneseq
    %v1049 = vshrl.u32 %v1048, 7
    %v1050 = vsub.s32 0, %v1049
    %v1051 = vrot.slane %v1046, %v1050
    %v1052 = vcombine.high %v1051, %v1051
    %v1054 = vunpack.c.l.s4 1966171168
    %v1055 = vunpack.c.0.s8 %v1054
    %v1056 = vlaneseq
    %v1057 = vshrl.u32 %v1056, 7
    %v1058 = vsub.s32 %v1055, %v1057
    %v1059 = vrot.slane %v1051, %v1058
    %v1061 = vunpack.c.l.s4 1966171168
    %v1062 = vunpack.c.0.s8 %v1061
    %v1063 = vlaneseq
    %v1064 = vshrl.u32 %v1063, 7
    %v1065 = vsub.s32 %v1062, %v1064
    %v1066 = vrot.slane %v1052, %v1065
    %v1067 = vcombine.high %v1059, %v1059
    %v1068 = vcombine.high %v1066, %v1066
    %v1070 = vunpack.c.l.s4 1966171168
    %v1071 = vunpack.c.0.s8 %v1070
    %v1072 = vlaneseq
    %v1073 = vshrl.u32 %v1072, 7
    %v1074 = vsub.s32 %v1071, %v1073
    %v1075 = vrot.slane %v1059, %v1074
    %v1077 = vunpack.c.l.s4 1966171168
    %v1078 = vunpack.c.0.s8 %v1077
    %v1079 = vlaneseq
    %v1080 = vshrl.u32 %v1079, 7
    %v1081 = vsub.s32 %v1078, %v1080
    %v1082 = vrot.slane %v1066, %v1081
    %v1084 = vunpack.c.l.s4 1966171168
    %v1085 = vunpack.c.0.s8 %v1084
    %v1086 = vlaneseq
    %v1087 = vshrl.u32 %v1086, 7
    %v1088 = vsub.s32 %v1085, %v1087
    %v1089 = vrot.slane %v1067, %v1088
    %v1091 = vunpack.c.l.s4 1966171168
    %v1092 = vunpack.c.0.s8 %v1091
    %v1093 = vlaneseq
    %v1094 = vshrl.u32 %v1093, 7
    %v1095 = vsub.s32 %v1092, %v1094
    %v1096 = vrot.slane %v1068, %v1095
    %v1097 = vcombine.high %v1075, %v1075
    %v1098 = vcombine.high %v1082, %v1082
    %v1099 = vcombine.high %v1089, %v1089
    %v1100 = vcombine.high %v1096, %v1096
    %v1109 = vadd.f32 %v1038, %v1075
    %v1110 = vadd.f32 %v1039, %v1089
    %v1111 = vadd.f32 %v1040, %v1097
    %v1112 = vadd.f32 %v1041, %v1099
    %v1113 = vadd.f32 %v1042, %v1082
    %v1114 = vadd.f32 %v1043, %v1096
    %v1115 = vadd.f32 %v1044, %v1098
    %v1116 = vadd.f32 %v1045, %v1100
    %v1118 = vcombine.high %v316, %v316
    %v1120 = vunpack.c.l.s4 1966171168
    %v1121 = vunpack.c.0.s8 %v1120
    %v1122 = vlaneseq
    %v1123 = vshrl.u32 %v1122, 7
    %v1124 = vsub.s32 %v1121, %v1123
    %v1125 = vrot.slane %v316, %v1124
    %v1127 = vunpack.c.l.s4 1966171168
    %v1128 = vunpack.c.0.s8 %v1127
    %v1129 = vlaneseq
    %v1130 = vshrl.u32 %v1129, 7
    %v1131 = vsub.s32 %v1128, %v1130
    %v1132 = vrot.slane %v1118, %v1131
    %v1133 = vcombine.high %v1125, %v1125
    %v1134 = vcombine.high %v1132, %v1132
    %v1136 = vunpack.c.l.s4 1966171168
    %v1137 = vunpack.c.0.s8 %v1136
    %v1138 = vlaneseq
    %v1139 = vshrl.u32 %v1138, 7
    %v1140 = vsub.s32 %v1137, %v1139
    %v1141 = vrot.slane %v1125, %v1140
    %v1143 = vunpack.c.l.s4 1966171168
    %v1144 = vunpack.c.0.s8 %v1143
    %v1145 = vlaneseq
    %v1146 = vshrl.u32 %v1145, 7
    %v1147 = vsub.s32 %v1144, %v1146
    %v1148 = vrot.slane %v1132, %v1147
    %v1150 = vunpack.c.l.s4 1966171168
    %v1151 = vunpack.c.0.s8 %v1150
    %v1152 = vlaneseq
    %v1153 = vshrl.u32 %v1152, 7
    %v1154 = vsub.s32 %v1151, %v1153
    %v1155 = vrot.slane %v1133, %v1154
    %v1157 = vunpack.c.l.s4 1966171168
    %v1158 = vunpack.c.0.s8 %v1157
    %v1159 = vlaneseq
    %v1160 = vshrl.u32 %v1159, 7
    %v1161 = vsub.s32 %v1158, %v1160
    %v1162 = vrot.slane %v1134, %v1161
    %v1163 = vcombine.high %v1141, %v1141
    %v1164 = vcombine.high %v1148, %v1148
    %v1165 = vcombine.high %v1155, %v1155
    %v1166 = vcombine.high %v1162, %v1162
    %1167 = vrot.lane.b32.xlu0 %v1141, 64
    %v1168 = vpop.permute.xlu0 %1167
    %1169 = vrot.lane.b32.xlu0 %v1155, 64
    %v1170 = vpop.permute.xlu0 %1169
    %1171 = vrot.lane.b32.xlu0 %v1163, 64
    %v1172 = vpop.permute.xlu0 %1171
    %1173 = vrot.lane.b32.xlu0 %v1165, 64
    %v1174 = vpop.permute.xlu0 %1173
    %1175 = vrot.lane.b32.xlu0 %v1148, 64
    %v1176 = vpop.permute.xlu0 %1175
    %1177 = vrot.lane.b32.xlu0 %v1162, 64
    %v1178 = vpop.permute.xlu0 %1177
    %1179 = vrot.lane.b32.xlu0 %v1164, 64
    %v1180 = vpop.permute.xlu0 %1179
    %1181 = vrot.lane.b32.xlu0 %v1166, 64
    %v1182 = vpop.permute.xlu0 %1181
    %v1191 = vmul.f32 %v1109, %v1168
    %v1192 = vmul.f32 %v1110, %v1170
    %v1193 = vmul.f32 %v1111, %v1172
    %v1194 = vmul.f32 %v1112, %v1174
    %v1195 = vmul.f32 %v1113, %v1176
    %v1196 = vmul.f32 %v1114, %v1178
    %v1197 = vmul.f32 %v1115, %v1180
    %v1198 = vmul.f32 %v1116, %v1182
    %v1199 = vpack.c.bf16 %v1191, %v1191
    %v1200 = vpack.c.bf16 %v1192, %v1192
    %v1201 = vpack.c.bf16 %v1193, %v1193
    %v1202 = vpack.c.bf16 %v1194, %v1194
    %v1203 = vpack.c.bf16 %v1195, %v1195
    %v1204 = vpack.c.bf16 %v1196, %v1196
    %v1205 = vpack.c.bf16 %v1197, %v1197
    %v1206 = vpack.c.bf16 %v1198, %v1198
    %v1207 = vld [vmem:[%s16] sm:$0xf]
    %v1208 = vld [vmem:[%s16 + $0x4] sm:$0xf]
    %v1209 = vld [vmem:[%s16 + $0x8] sm:$0xf]
    %v1210 = vld [vmem:[%s16 + $0xc] sm:$0xf]
    %v1211 = vld [vmem:[%s16 + $0x10] sm:$0xf]
    %v1212 = vld [vmem:[%s16 + $0x14] sm:$0xf]
    %v1213 = vld [vmem:[%s16 + $0x18] sm:$0xf]
    %v1214 = vld [vmem:[%s16 + $0x1c] sm:$0xf]
    %v1223 = vunpack.c.l.b16 %v1199
    %v1224 = vunpack.c.l.b16 %v1200
    %v1225 = vunpack.c.l.b16 %v1201
    %v1226 = vunpack.c.l.b16 %v1202
    %v1227 = vunpack.c.l.b16 %v1203
    %v1228 = vunpack.c.l.b16 %v1204
    %v1229 = vunpack.c.l.b16 %v1205
    %v1230 = vunpack.c.l.b16 %v1206
    %v1231 = vrot.slane %v1224, 7
    %vm1232 = vcmask 1041409
    %v1233 = vsel %vm1232, %v1231, %v1223
    %v1234 = vrot.slane %v1225, 6
    %vm1235 = vcmask 1042434
    %v1236 = vsel %vm1235, %v1234, %v1233
    %v1237 = vrot.slane %v1226, 5
    %vm1238 = vcmask 1043459
    %v1239 = vsel %vm1238, %v1237, %v1236
    %v1240 = vrot.slane %v1227, 4
    %vm1241 = vcmask 1044484
    %v1242 = vsel %vm1241, %v1240, %v1239
    %v1243 = vrot.slane %v1228, 3
    %vm1244 = vcmask 1045509
    %v1245 = vsel %vm1244, %v1243, %v1242
    %v1246 = vrot.slane %v1229, 2
    %vm1247 = vcmask 1046534
    %v1248 = vsel %vm1247, %v1246, %v1245
    %v1249 = vrot.slane %v1230, 1
    %vm1250 = vcmask 1047559
    %v1251 = vsel %vm1250, %v1249, %v1248
    %v1252 = vpack.c.b16 %v1251, %v1251
    %v1261 = vunpack.c.l.b16 %v1207
    %v1262 = vunpack.c.l.b16 %v1208
    %v1263 = vunpack.c.l.b16 %v1209
    %v1264 = vunpack.c.l.b16 %v1210
    %v1265 = vunpack.c.l.b16 %v1211
    %v1266 = vunpack.c.l.b16 %v1212
    %v1267 = vunpack.c.l.b16 %v1213
    %v1268 = vunpack.c.l.b16 %v1214
    %v1269 = vpack.c.b16 %v1262, %v1261
    %v1270 = vpack.c.b16 %v1264, %v1263
    %v1271 = vpack.c.b16 %v1266, %v1265
    %v1272 = vpack.c.b16 %v1268, %v1267
    %v1278 = vsel %vm93, %v1252, 0
    %1280 = vmatprep.subr.bf16.mxu0 0
    %1281 = vmatpush1.bf16.msra.mxu0 %v1269
    %1282 = vmatprep.subr.bf16.mxu0 0
    %1283 = vmatpush1.bf16.msra.mxu0 %v1270
    %1284 = vmatprep.subr.bf16.mxu0 0
    %1285 = vmatpush1.bf16.msra.mxu0 %v1271
    %1286 = vmatprep.subr.bf16.mxu0 0
    %1287 = vmatpush1.bf16.msra.mxu0 %v1272
    %1288 = vmatprep.subr.bf16.mxu0 0
    %1289 = vmatpush1.bf16.msra.mxu0 0
    %1290 = vmatprep.subr.bf16.mxu0 0
    %1291 = vmatpush1.bf16.msra.mxu0 0
    %1292 = vmatprep.subr.bf16.mxu0 0
    %1293 = vmatpush1.bf16.msra.mxu0 0
    %1294 = vmatprep.subr.bf16.mxu0 0
    %1295 = vmatpush1.bf16.msra.mxu0 0
    %1296 = vmatprep.subr.bf16.mxu0 0
    %1297 = vmatpush1.bf16.msra.mxu0 0
    %1298 = vmatprep.subr.bf16.mxu0 0
    %1299 = vmatpush1.bf16.msra.mxu0 0
    %1300 = vmatprep.subr.bf16.mxu0 0
    %1301 = vmatpush1.bf16.msra.mxu0 0
    %1302 = vmatprep.subr.bf16.mxu0 0
    %1303 = vmatpush1.bf16.msra.mxu0 0
    %1304 = vmatprep.subr.bf16.mxu0 0
    %1305 = vmatpush1.bf16.msra.mxu0 0
    %1306 = vmatprep.subr.bf16.mxu0 0
    %1307 = vmatpush1.bf16.msra.mxu0 0
    %1308 = vmatprep.subr.bf16.mxu0 0
    %1309 = vmatpush1.bf16.msra.mxu0 0
    %1310 = vmatprep.subr.bf16.mxu0 0
    %1311 = vmatpush1.bf16.msra.mxu0 0
    %1312 = vmatprep.mubr.bf16.mxu0 0
    %1313 = vmatmul.mubr.bf16.gmra.mrb[0].mxu0 %v1278
    %v1314 = vpop.f32.mrb[0].mxu0
    %v1315 = vadd.f32 0.0, %v1314
    %v1316 = vpop.f32.mrb[0].mxu0
    %v1317 = vpop.f32.mrb[0].mxu0
    %v1318 = vpop.f32.mrb[0].mxu0
    %1319 = vdwg.mxu0
    %v1320 = vadd.f32 %v121, %v1315
    %v1321 = vld [vmem:[%s8] sm:$0x1]
    %v1322 = vld [vmem:[%s9] sm:$0x1]
    %v1323 = vsel %vm93, %v1320, 0.0
    %1324 = vadd.xlane.f32.xlu0 %v1323
    %v1325 = vpop.xlane.xlu0 %1324
    %v1326 = vmul.f32 %v1325, %v97
    %v1327 = vsub.f32 %v1320, %v1326
    %v1328 = vmul.f32 %v1327, %v1327
    %v1329 = vsel %vm93, %v1328, 0.0
    %1330 = vadd.xlane.f32.xlu0 %v1329
    %v1331 = vpop.xlane.xlu0 %1330
    %v1332 = vmul.f32 %v1331, %v97
    %v1333 = vadd.f32 %v1332, 1e-05
    %v1334 = vrsqrt.pop %v1333
    %v1335 = vmul.f32 %v1327, %v1334
    %v1337 = vlaneseq
    %v1338 = vshrl.u32 %v1337, 7
    %v1339 = vsub.s32 0, %v1338
    %v1340 = vrot.slane %v1321, %v1339
    %v1342 = vmul.f32 %v1335, %v1340
    %v1344 = vlaneseq
    %v1345 = vshrl.u32 %v1344, 7
    %v1346 = vsub.s32 0, %v1345
    %v1347 = vrot.slane %v1322, %v1346
    %v1349 = vadd.f32 %v1342, %v1347
    %1350 = vst.msk [vmem:[#allocation13 - $0x7] sm:$0x80] %vm151, %v1349
    %v1351 = vld [vmem:[%s3] sm:$0x1]
    %v1353 = vrot.slane %v1349, 7
    %v1355 = vsel %vm157, %v1351, %v1353
    %v1356 = vsub.f32 %v1349, %v1355
    %1358 = vrot.lane.b32.xlu0 %v1356, 64
    %v1359 = vpop.permute.xlu0 %1358
    %v1361 = vsel %vm93, %v1355, %v1359
    %v1362 = vpack.c.bf16 %v1361, %v1361
    %v1363 = vld [vmem:[%s19] sm:$0xff]
    %v1364 = vld [vmem:[%s19 + $0x8] sm:$0xff]
    %v1365 = vld [vmem:[%s19 + $0x10] sm:$0xff]
    %v1366 = vld [vmem:[%s19 + $0x18] sm:$0xff]
    %v1367 = vld [vmem:[%s19 + $0x20] sm:$0xff]
    %v1368 = vld [vmem:[%s19 + $0x28] sm:$0xff]
    %v1369 = vld [vmem:[%s19 + $0x30] sm:$0xff]
    %v1370 = vld [vmem:[%s19 + $0x38] sm:$0xff]
    %v1371 = vld [vmem:[%s19 + $0x40] sm:$0xff]
    %v1372 = vld [vmem:[%s19 + $0x48] sm:$0xff]
    %v1373 = vld [vmem:[%s19 + $0x50] sm:$0xff]
    %v1374 = vld [vmem:[%s19 + $0x58] sm:$0xff]
    %v1375 = vld [vmem:[%s19 + $0x60] sm:$0xff]
    %v1376 = vld [vmem:[%s19 + $0x68] sm:$0xff]
    %v1377 = vld [vmem:[%s19 + $0x70] sm:$0xff]
    %v1378 = vld [vmem:[%s19 + $0x78] sm:$0xff]
    %v1395 = vunpack.c.l.b16 %v1363
    %v1396 = vunpack.c.h.b16 %v1363
    %v1397 = vunpack.c.l.b16 %v1364
    %v1398 = vunpack.c.h.b16 %v1364
    %v1399 = vunpack.c.l.b16 %v1365
    %v1400 = vunpack.c.h.b16 %v1365
    %v1401 = vunpack.c.l.b16 %v1366
    %v1402 = vunpack.c.h.b16 %v1366
    %v1403 = vunpack.c.l.b16 %v1367
    %v1404 = vunpack.c.h.b16 %v1367
    %v1405 = vunpack.c.l.b16 %v1368
    %v1406 = vunpack.c.h.b16 %v1368
    %v1407 = vunpack.c.l.b16 %v1369
    %v1408 = vunpack.c.h.b16 %v1369
    %v1409 = vunpack.c.l.b16 %v1370
    %v1410 = vunpack.c.h.b16 %v1370
    %v1411 = vunpack.c.l.b16 %v1371
    %v1412 = vunpack.c.h.b16 %v1371
    %v1413 = vunpack.c.l.b16 %v1372
    %v1414 = vunpack.c.h.b16 %v1372
    %v1415 = vunpack.c.l.b16 %v1373
    %v1416 = vunpack.c.h.b16 %v1373
    %v1417 = vunpack.c.l.b16 %v1374
    %v1418 = vunpack.c.h.b16 %v1374
    %v1419 = vunpack.c.l.b16 %v1375
    %v1420 = vunpack.c.h.b16 %v1375
    %v1421 = vunpack.c.l.b16 %v1376
    %v1422 = vunpack.c.h.b16 %v1376
    %v1423 = vunpack.c.l.b16 %v1377
    %v1424 = vunpack.c.h.b16 %v1377
    %v1425 = vunpack.c.l.b16 %v1378
    %v1426 = vunpack.c.h.b16 %v1378
    %v1427 = vpack.c.b16 %v1397, %v1395
    %v1428 = vpack.c.b16 %v1398, %v1396
    %v1429 = vpack.c.b16 %v1401, %v1399
    %v1430 = vpack.c.b16 %v1402, %v1400
    %v1431 = vpack.c.b16 %v1405, %v1403
    %v1432 = vpack.c.b16 %v1406, %v1404
    %v1433 = vpack.c.b16 %v1409, %v1407
    %v1434 = vpack.c.b16 %v1410, %v1408
    %v1435 = vpack.c.b16 %v1413, %v1411
    %v1436 = vpack.c.b16 %v1414, %v1412
    %v1437 = vpack.c.b16 %v1417, %v1415
    %v1438 = vpack.c.b16 %v1418, %v1416
    %v1439 = vpack.c.b16 %v1421, %v1419
    %v1440 = vpack.c.b16 %v1422, %v1420
    %v1441 = vpack.c.b16 %v1425, %v1423
    %v1442 = vpack.c.b16 %v1426, %v1424
    %1459 = vmatprep.subr.bf16.mxu0 %v1428
    %1460 = vmatpush1.bf16.msra.mxu0 %v1427
    %1461 = vmatprep.subr.bf16.mxu0 %v1430
    %1462 = vmatpush1.bf16.msra.mxu0 %v1429
    %1463 = vmatprep.subr.bf16.mxu0 %v1432
    %1464 = vmatpush1.bf16.msra.mxu0 %v1431
    %1465 = vmatprep.subr.bf16.mxu0 %v1434
    %1466 = vmatpush1.bf16.msra.mxu0 %v1433
    %1467 = vmatprep.subr.bf16.mxu0 %v1436
    %1468 = vmatpush1.bf16.msra.mxu0 %v1435
    %1469 = vmatprep.subr.bf16.mxu0 %v1438
    %1470 = vmatpush1.bf16.msra.mxu0 %v1437
    %1471 = vmatprep.subr.bf16.mxu0 %v1440
    %1472 = vmatpush1.bf16.msra.mxu0 %v1439
    %1473 = vmatprep.subr.bf16.mxu0 %v1442
    %1474 = vmatpush1.bf16.msra.mxu0 %v1441
    %1475 = vmatprep.subr.bf16.mxu0 0
    %1476 = vmatpush1.bf16.msra.mxu0 0
    %1477 = vmatprep.subr.bf16.mxu0 0
    %1478 = vmatpush1.bf16.msra.mxu0 0
    %1479 = vmatprep.subr.bf16.mxu0 0
    %1480 = vmatpush1.bf16.msra.mxu0 0
    %1481 = vmatprep.subr.bf16.mxu0 0
    %1482 = vmatpush1.bf16.msra.mxu0 0
    %1483 = vmatprep.subr.bf16.mxu0 0
    %1484 = vmatpush1.bf16.msra.mxu0 0
    %1485 = vmatprep.subr.bf16.mxu0 0
    %1486 = vmatpush1.bf16.msra.mxu0 0
    %1487 = vmatprep.subr.bf16.mxu0 0
    %1488 = vmatpush1.bf16.msra.mxu0 0
    %1489 = vmatprep.subr.bf16.mxu0 0
    %1490 = vmatpush1.bf16.msra.mxu0 0
    %1491 = vmatprep.mubr.bf16.mxu0 0
    %1492 = vmatmul.mubr.bf16.gmra.mrb[0].mxu0 %v1362
    %v1493 = vpop.f32.mrb[0].mxu0
    %v1494 = vadd.f32 0.0, %v1493
    %v1495 = vpop.f32.mrb[0].mxu0
    %v1496 = vadd.f32 0.0, %v1495
    %v1497 = vpop.f32.mrb[0].mxu0
    %v1498 = vpop.f32.mrb[0].mxu0
    %1499 = vdwg.mxu0
    %v1500 = vmax.f32 %v1494, 0.0
    %v1501 = vmul.f32 %v1500, %v1500
    %v1502 = vxor.u32 %v1496, 2147483648
    %v1503 = vmul.f32 %v1502, 1.442695
    %v1504 = vpow.pop %v1503
    %v1505 = vadd.f32 %v1504, 1.0
    %v1506 = vrcp.pop %v1505
    %v1507 = vmul.f32 1.0, %v1506
    %v1508 = vpack.c.bf16 %v1501, %v1501
    %v1509 = vld [vmem:[%s20] sm:$0xf]
    %v1510 = vld [vmem:[%s20 + $0x4] sm:$0xf]
    %v1511 = vld [vmem:[%s20 + $0x8] sm:$0xf]
    %v1512 = vld [vmem:[%s20 + $0xc] sm:$0xf]
    %v1513 = vld [vmem:[%s20 + $0x10] sm:$0xf]
    %v1514 = vld [vmem:[%s20 + $0x14] sm:$0xf]
    %v1515 = vld [vmem:[%s20 + $0x18] sm:$0xf]
    %v1516 = vld [vmem:[%s20 + $0x1c] sm:$0xf]
    %v1517 = vld [vmem:[%s20 + $0x20] sm:$0xf]
    %v1518 = vld [vmem:[%s20 + $0x24] sm:$0xf]
    %v1519 = vld [vmem:[%s20 + $0x28] sm:$0xf]
    %v1520 = vld [vmem:[%s20 + $0x2c] sm:$0xf]
    %v1521 = vld [vmem:[%s20 + $0x30] sm:$0xf]
    %v1522 = vld [vmem:[%s20 + $0x34] sm:$0xf]
    %v1523 = vld [vmem:[%s20 + $0x38] sm:$0xf]
    %v1524 = vld [vmem:[%s20 + $0x3c] sm:$0xf]
    %v1541 = vunpack.c.l.b16 %v1509
    %v1542 = vunpack.c.l.b16 %v1510
    %v1543 = vunpack.c.l.b16 %v1511
    %v1544 = vunpack.c.l.b16 %v1512
    %v1545 = vunpack.c.l.b16 %v1513
    %v1546 = vunpack.c.l.b16 %v1514
    %v1547 = vunpack.c.l.b16 %v1515
    %v1548 = vunpack.c.l.b16 %v1516
    %v1549 = vunpack.c.l.b16 %v1517
    %v1550 = vunpack.c.l.b16 %v1518
    %v1551 = vunpack.c.l.b16 %v1519
    %v1552 = vunpack.c.l.b16 %v1520
    %v1553 = vunpack.c.l.b16 %v1521
    %v1554 = vunpack.c.l.b16 %v1522
    %v1555 = vunpack.c.l.b16 %v1523
    %v1556 = vunpack.c.l.b16 %v1524
    %v1557 = vpack.c.b16 %v1542, %v1541
    %v1558 = vpack.c.b16 %v1544, %v1543
    %v1559 = vpack.c.b16 %v1546, %v1545
    %v1560 = vpack.c.b16 %v1548, %v1547
    %v1561 = vpack.c.b16 %v1550, %v1549
    %v1562 = vpack.c.b16 %v1552, %v1551
    %v1563 = vpack.c.b16 %v1554, %v1553
    %v1564 = vpack.c.b16 %v1556, %v1555
    %1573 = vmatprep.subr.bf16.mxu0 0
    %1574 = vmatpush1.bf16.msra.mxu0 %v1557
    %1575 = vmatprep.subr.bf16.mxu0 0
    %1576 = vmatpush1.bf16.msra.mxu0 %v1558
    %1577 = vmatprep.subr.bf16.mxu0 0
    %1578 = vmatpush1.bf16.msra.mxu0 %v1559
    %1579 = vmatprep.subr.bf16.mxu0 0
    %1580 = vmatpush1.bf16.msra.mxu0 %v1560
    %1581 = vmatprep.subr.bf16.mxu0 0
    %1582 = vmatpush1.bf16.msra.mxu0 %v1561
    %1583 = vmatprep.subr.bf16.mxu0 0
    %1584 = vmatpush1.bf16.msra.mxu0 %v1562
    %1585 = vmatprep.subr.bf16.mxu0 0
    %1586 = vmatpush1.bf16.msra.mxu0 %v1563
    %1587 = vmatprep.subr.bf16.mxu0 0
    %1588 = vmatpush1.bf16.msra.mxu0 %v1564
    %1589 = vmatprep.subr.bf16.mxu0 0
    %1590 = vmatpush1.bf16.msra.mxu0 0
    %1591 = vmatprep.subr.bf16.mxu0 0
    %1592 = vmatpush1.bf16.msra.mxu0 0
    %1593 = vmatprep.subr.bf16.mxu0 0
    %1594 = vmatpush1.bf16.msra.mxu0 0
    %1595 = vmatprep.subr.bf16.mxu0 0
    %1596 = vmatpush1.bf16.msra.mxu0 0
    %1597 = vmatprep.subr.bf16.mxu0 0
    %1598 = vmatpush1.bf16.msra.mxu0 0
    %1599 = vmatprep.subr.bf16.mxu0 0
    %1600 = vmatpush1.bf16.msra.mxu0 0
    %1601 = vmatprep.subr.bf16.mxu0 0
    %1602 = vmatpush1.bf16.msra.mxu0 0
    %1603 = vmatprep.subr.bf16.mxu0 0
    %1604 = vmatpush1.bf16.msra.mxu0 0
    %1605 = vmatprep.mubr.bf16.mxu0 0
    %1606 = vmatmul.mubr.bf16.gmra.mrb[0].mxu0 %v1508
    %v1607 = vpop.f32.mrb[0].mxu0
    %v1608 = vadd.f32 0.0, %v1607
    %v1609 = vpop.f32.mrb[0].mxu0
    %v1610 = vpop.f32.mrb[0].mxu0
    %v1611 = vpop.f32.mrb[0].mxu0
    %1612 = vdwg.mxu0
    %v1613 = vmul.f32 %v1507, %v1608
    %v1614 = vadd.f32 %v1320, %v1613
    %1615 = vst.msk [vmem:[#allocation9] sm:$0xff] %vm93, %v1614
    // Predicated region
    $region90: #{tpu_custom_call.1} parent=1 // pred_check
      _
    $region91: #{tpu_custom_call.1} parent=1 // pred_check_branch
      %1617 = sbr.rel (0) target = $region93
    $region92: #{tpu_custom_call.1} parent=1 // pred_region
      %s1619 = ssub.s32 128, 128
      %1620 = vsyncadd [#allocation8], %s1619
      %s1622 = sshll.u32 [#allocation9], 4
      %s1623 = int_to_ptr.vmem [resolvable:$true] %s1622
      %1625 = dma.vmem_to_hbm [thread:$0]  %s1623, 128, %s21, [#allocation8]
    $region93: #{tpu_custom_call.1} parent=1 // pred_fallthru
      _
    // Predicated region
    $region94: #{tpu_custom_call.1} parent=1 // pred_check
      _
    $region95: #{tpu_custom_call.1} parent=1 // pred_check_branch
      %1627 = sbr.rel (0) target = $region97
    $region96: #{tpu_custom_call.1} parent=1 // pred_region
      %s1629 = ssub.s32 16, 16
      %1630 = vsyncadd [#allocation11], %s1629
      %s1632 = sshll.u32 [#allocation10], 4
      %s1633 = int_to_ptr.vmem [resolvable:$true] %s1632
      %1635 = dma.vmem_to_hbm [thread:$0]  %s1633, 16, %s22, [#allocation11]
    $region97: #{tpu_custom_call.1} parent=1 // pred_fallthru
      _
    // Predicated region
    $region98: #{tpu_custom_call.1} parent=1 // pred_check
      _
    $region99: #{tpu_custom_call.1} parent=1 // pred_check_branch
      %1637 = sbr.rel (0) target = $region101
    $region100: #{tpu_custom_call.1} parent=1 // pred_region
      %s1639 = ssub.s32 1024, 1024
      %1640 = vsyncadd [#allocation11], %s1639
      %s1641 = sshll.u32 [#allocation12], 4
      %s1642 = int_to_ptr.vmem [resolvable:$true] %s1641
      %1647 = dma.vmem_to_hbm [thread:$0]  %s1642, 1024, %s23, [#allocation11], 128, 128, 8
    $region101: #{tpu_custom_call.1} parent=1 // pred_fallthru
      _
    // Predicated region
    $region102: #{tpu_custom_call.1} parent=1 // pred_check
      _
    $region103: #{tpu_custom_call.1} parent=1 // pred_check_branch
      %1649 = sbr.rel (0) target = $region105
    $region104: #{tpu_custom_call.1} parent=1 // pred_region
      %s1651 = ssub.s32 16, 16
      %1652 = vsyncadd [#allocation14], %s1651
      %s1654 = sshll.u32 [#allocation13], 4
      %s1655 = int_to_ptr.vmem [resolvable:$true] %s1654
      %1657 = dma.vmem_to_hbm [thread:$0]  %s1655, 16, %s24, [#allocation14]
    $region105: #{tpu_custom_call.1} parent=1 // pred_fallthru
      _
    // Predicated region
    $region106: #{tpu_custom_call.1} parent=1 // pred_check
      _
    $region107: #{tpu_custom_call.1} parent=1 // pred_check_branch
      %1659 = sbr.rel (0) target = $region109
    $region108: #{tpu_custom_call.1} parent=1 // pred_region
      %1660 = dma.done [#allocation8], 128
    $region109: #{tpu_custom_call.1} parent=1 // pred_fallthru
      _
    // Predicated region
    $region110: #{tpu_custom_call.1} parent=1 // pred_check
      _
    $region111: #{tpu_custom_call.1} parent=1 // pred_check_branch
      %1662 = sbr.rel (0) target = $region113
    $region112: #{tpu_custom_call.1} parent=1 // pred_region
      %1663 = dma.done [#allocation11], 16
    $region113: #{tpu_custom_call.1} parent=1 // pred_fallthru
      _
    // Predicated region
    $region114: #{tpu_custom_call.1} parent=1 // pred_check
      _
    $region115: #{tpu_custom_call.1} parent=1 // pred_check_branch
      %1665 = sbr.rel (0) target = $region117
    $region116: #{tpu_custom_call.1} parent=1 // pred_region
      %1666 = dma.done [#allocation11], 1024
    $region117: #{tpu_custom_call.1} parent=1 // pred_fallthru
      _
    // Predicated region
    $region118: #{tpu_custom_call.1} parent=1 // pred_check
      _
    $region119: #{tpu_custom_call.1} parent=1 // pred_check_branch
      %1668 = sbr.rel (0) target = $region121
    $region120: #{tpu_custom_call.1} parent=1 // pred_region
      %1669 = dma.done [#allocation14], 16
    $region121: #{tpu_custom_call.1} parent=1 // pred_fallthru
      _
    %1670 = vsyncpa [#allocation7], 1
    %1671 = vsyncpa [#allocation8], 1
    %1672 = vsyncpa [#allocation11], 1
    %1673 = vsyncpa [#allocation14], 1

</llo_original>
